<compile_context>
chip_gen: v7x
topology: tpu7x:2x2x1
jax: 0.10.0
libtpu: 0.0.40
codegen_flags: <defaults>
</compile_context>

<pallas_src>
import jax
import jax.numpy as jnp
from jax import lax
from jax.experimental import pallas as pl
from jax.experimental.pallas import tpu as pltpu

_BN_EPS = 1e-5
_LANE = 128
_TARGET_TN = 512                      # lane tile sweet spot for mem-bound ops
_VMEM_LIMIT = 32 * 1024 * 1024


def _round_up(x, m):
    return (x + m - 1) // m * m


def _stats_kernel(xr_ref, xi_ref, wr_ref, wi_ref, sum_ref, ssq_ref):
    """Pass 1: per-channel sum / sum-of-squares of y = Wr@xr + Wi@xi.

    xr_ref/xi_ref: (C, TN)   wr_ref/wi_ref: (Cout2, C)
    sum_ref/ssq_ref: (Cout2, 1) f32, VMEM-resident across the whole grid.
    """
    @pl.when((pl.program_id(0) == 0) & (pl.program_id(1) == 0))
    def _():
        sum_ref[...] = jnp.zeros_like(sum_ref)
        ssq_ref[...] = jnp.zeros_like(ssq_ref)

    y = jnp.dot(wr_ref[...], xr_ref[...], preferred_element_type=jnp.float32)
    y = y + jnp.dot(wi_ref[...], xi_ref[...], preferred_element_type=jnp.float32)
    sum_ref[...] = sum_ref[...] + jnp.sum(y, axis=1, keepdims=True)
    ssq_ref[...] = ssq_ref[...] + jnp.sum(y * y, axis=1, keepdims=True)


def _apply_kernel(xr_ref, xi_ref, wr_ref, wi_ref, scale_ref, shift_ref, o_ref):
    """Pass 2: recompute y, apply folded BN (y*scale + shift) and ReLU."""
    y = jnp.dot(wr_ref[...], xr_ref[...], preferred_element_type=jnp.float32)
    y = y + jnp.dot(wi_ref[...], xi_ref[...], preferred_element_type=jnp.float32)
    o_ref[...] = jnp.maximum(y * scale_ref[...] + shift_ref[...], 0.0)


def _conv_bn_relu(xr, xi, wr, wi, gamma, beta, n_sites):
    """xr/xi: (B, C, S_pad) f32 (zero-padded past the true spatial size).
       wr/wi: (Cout2, C).  gamma/beta: (Cout2, 1).
       Returns (B, Cout2, S_pad) f32; BN uses the true site count n_sites."""
    b, c, s_pad = xr.shape
    cout2 = wr.shape[0]
    tn = s_pad if s_pad <= _TARGET_TN else _TARGET_TN
    grid = (b, s_pad // tn)

    x_spec = pl.BlockSpec((None, c, tn), lambda bb, j: (bb, 0, j))
    w_spec = pl.BlockSpec((cout2, c), lambda bb, j: (0, 0))       # resident
    vec_spec = pl.BlockSpec((cout2, 1), lambda bb, j: (0, 0))     # resident

    # ---- pass 1: global per-channel stats ---------------------------------
    ssum, ssq = pl.pallas_call(
        _stats_kernel,
        out_shape=(jax.ShapeDtypeStruct((cout2, 1), jnp.float32),
                   jax.ShapeDtypeStruct((cout2, 1), jnp.float32)),
        grid=grid,
        in_specs=[x_spec, x_spec, w_spec, w_spec],
        out_specs=(vec_spec, vec_spec),
        compiler_params=pltpu.CompilerParams(
            dimension_semantics=("arbitrary", "arbitrary"),
            vmem_limit_bytes=_VMEM_LIMIT),
    )(xr, xi, wr, wi)

    # Fold BN into a single per-channel scale/shift (tiny wrapper-side math).
    mean = ssum * (1.0 / n_sites)
    var = jnp.maximum(ssq * (1.0 / n_sites) - mean * mean, 0.0)   # biased var
    inv_std = lax.rsqrt(var + _BN_EPS)
    scale = gamma * inv_std                                       # (Cout2, 1)
    shift = beta - mean * scale                                   # (Cout2, 1)

    # ---- pass 2: normalize + ReLU, lane-dense output ----------------------
    out = pl.pallas_call(
        _apply_kernel,
        out_shape=jax.ShapeDtypeStruct((b, cout2, s_pad), jnp.float32),
        grid=grid,
        in_specs=[x_spec, x_spec, w_spec, w_spec, vec_spec, vec_spec],
        out_specs=pl.BlockSpec((None, cout2, tn), lambda bb, j: (bb, 0, j)),
        compiler_params=pltpu.CompilerParams(
            dimension_semantics=("parallel", "parallel"),
            vmem_limit_bytes=_VMEM_LIMIT),
    )(xr, xi, wr, wi, scale, shift)
    return out


@jax.jit
def fourier_unit_forward(x, conv_w, bn_gamma, bn_beta):
    """x: (B, C, H, W) f32 NCHW.  conv_w: (2*Cout, 2*Cin, 1, 1).
       bn_gamma/bn_beta: (2*Cout,).  Returns (B, Cout, H, W) f32."""
    b, c, h, w = x.shape
    cout2 = conv_w.shape[0]

    # rfftn over (H, W), ortho norm.
    ff = jnp.fft.rfftn(x, s=(h, w), axes=(2, 3), norm="ortho")    # (B,C,H,Wf) c64
    wf = ff.shape[-1]
    s = h * wf

    # channels-major, real/imag as two inputs -> no concat, no transposes.
    xr = jnp.real(ff).reshape(b, c, s).astype(jnp.float32)
    xi = jnp.imag(ff).reshape(b, c, s).astype(jnp.float32)

    # Pad the spatial (lane) dim so the lane tile evenly divides it.
    s_pad = s if s <= _TARGET_TN else _round_up(s, _TARGET_TN)
    if s_pad != s:
        pad = ((0, 0), (0, 0), (0, s_pad - s))
        xr = jnp.pad(xr, pad)
        xi = jnp.pad(xi, pad)

    # Split the 1x1-conv weight once: y = Wr @ real + Wi @ imag.
    w2 = conv_w.reshape(cout2, 2 * c).astype(jnp.float32)
    wr = w2[:, :c]
    wi = w2[:, c:]
    gamma = bn_gamma.reshape(cout2, 1).astype(jnp.float32)
    beta = bn_beta.reshape(cout2, 1).astype(jnp.float32)

    y = _conv_bn_relu(xr, xi, wr, wi, gamma, beta, n_sites=float(b * s))
    y = y[:, :, :s].reshape(b, cout2, h, wf)

    co = cout2 // 2
    comp = lax.complex(y[:, :co], y[:, co:])                      # (B,Cout,H,Wf)
    out = jnp.fft.irfftn(comp, s=(h, w), axes=(2, 3), norm="ortho")
    return out.astype(jnp.float32)


def _reference(x, conv_w, bn_gamma, bn_beta):
    """Pure-jnp reference of the PyTorch forward (training-mode BN)."""
    b, c, h, w = x.shape
    cout2 = conv_w.shape[0]
    ff = jnp.fft.rfftn(x, s=(h, w), axes=(2, 3), norm="ortho")
    cat = jnp.concatenate([jnp.real(ff), jnp.imag(ff)], axis=1)   # (B,2C,H,Wf)
    wmat = conv_w.reshape(cout2, 2 * c)
    y = jnp.einsum("oc,bchw->bohw", wmat, cat)
    mean = jnp.mean(y, axis=(0, 2, 3), keepdims=True)
    var = jnp.mean((y - mean) ** 2, axis=(0, 2, 3), keepdims=True)
    yn = (y - mean) * lax.rsqrt(var + _BN_EPS)
    yn = yn * bn_gamma.reshape(1, cout2, 1, 1) + bn_beta.reshape(1, cout2, 1, 1)
    yn = jnp.maximum(yn, 0.0)
    co = cout2 // 2
    comp = lax.complex(yn[:, :co], yn[:, co:])
    return jnp.fft.irfftn(comp, s=(h, w), axes=(2, 3), norm="ortho")


if __name__ == "__main__":
    key = jax.random.PRNGKey(0)
    k_x, k_w, k_g, k_b = jax.random.split(key, 4)

    B, C, H, W = 2, 4, 16, 16          # in_channels = out_channels = 4
    CIN2 = 2 * C
    COUT2 = 2 * C

    x = jax.random.normal(k_x, (B, C, H, W), dtype=jnp.float32)
    conv_w = 0.1 * jax.random.normal(k_w, (COUT2, CIN2, 1, 1), dtype=jnp.float32)
    bn_gamma = 1.0 + 0.05 * jax.random.normal(k_g, (COUT2,), dtype=jnp.float32)
    bn_beta = 0.05 * jax.random.normal(k_b, (COUT2,), dtype=jnp.float32)

    out = fourier_unit_forward(x, conv_w, bn_gamma, bn_beta)
    jax.block_until_ready(out)
    assert out.shape == (B, C, H, W), out.shape

    ref = _reference(x, conv_w, bn_gamma, bn_beta)
    max_err = float(jnp.max(jnp.abs(out - ref)))
    assert max_err < 1e-2, f"max abs err vs reference: {max_err}"
    print("KERNEL_OK")
</pallas_src>

<mosaic_0001>
module attributes {stable_mosaic.version = 11 : i64} {
  func.func @_stats_kernel(%arg0: i32, %arg1: i32, %arg2: memref<1x4x144xf32, #tpu.memory_space<vmem>>, %arg3: memref<1x4x144xf32, #tpu.memory_space<vmem>>, %arg4: memref<8x4xf32, #tpu.memory_space<vmem>>, %arg5: memref<8x4xf32, #tpu.memory_space<vmem>>, %arg6: memref<8x1xf32, #tpu.memory_space<vmem>>, %arg7: memref<8x1xf32, #tpu.memory_space<vmem>>) attributes {dimension_semantics = [#tpu.dimension_semantics<arbitrary>, #tpu.dimension_semantics<arbitrary>], iteration_bounds = array<i64: 2, 1>, scalar_prefetch = 0 : i64, scratch_operands = 0 : i64, tpu.core_type = #tpu.core_type<tc>, window_params = [{transform_indices = @transform_0, window_bounds = array<i64: 1, 4, 144>}, {transform_indices = @transform_1, window_bounds = array<i64: 1, 4, 144>}, {pipeline_mode = #tpu.pipeline_mode<synchronous>, transform_indices = @transform_2, window_bounds = array<i64: 8, 4>}, {pipeline_mode = #tpu.pipeline_mode<synchronous>, transform_indices = @transform_3, window_bounds = array<i64: 8, 4>}, {pipeline_mode = #tpu.pipeline_mode<synchronous>, transform_indices = @transform_4, window_bounds = array<i64: 8, 1>}, {pipeline_mode = #tpu.pipeline_mode<synchronous>, transform_indices = @transform_5, window_bounds = array<i64: 8, 1>}]} {
    %c0_i32 = arith.constant 0 : i32
    %0 = arith.cmpi eq, %arg0, %c0_i32 : i32
    %c0_i32_0 = arith.constant 0 : i32
    %1 = arith.cmpi eq, %arg1, %c0_i32_0 : i32
    %2 = arith.andi %0, %1 : i1
    %3 = arith.extui %2 : i1 to i32
    %c0_i32_1 = arith.constant 0 : i32
    %4 = arith.cmpi ne, %3, %c0_i32_1 : i32
    scf.if %4 {
      %cst_22 = arith.constant 0.000000e+00 : f32
      %25 = vector.broadcast %cst_22 : f32 to vector<8x1xf32>
      %c0_23 = arith.constant 0 : index
      %c0_24 = arith.constant 0 : index
      %26 = vector.load %arg6[%c0_23, %c0_24] : memref<8x1xf32, #tpu.memory_space<vmem>>, vector<8x1xf32>
      tpu.vector_store %arg6[%c0_23, %c0_24], %25 {strides = array<i32>} : memref<8x1xf32, #tpu.memory_space<vmem>>, vector<8x1xf32>,
      %cst_25 = arith.constant 0.000000e+00 : f32
      %27 = vector.broadcast %cst_25 : f32 to vector<8x1xf32>
      %c0_26 = arith.constant 0 : index
      %c0_27 = arith.constant 0 : index
      %28 = vector.load %arg7[%c0_26, %c0_27] : memref<8x1xf32, #tpu.memory_space<vmem>>, vector<8x1xf32>
      tpu.vector_store %arg7[%c0_26, %c0_27], %27 {strides = array<i32>} : memref<8x1xf32, #tpu.memory_space<vmem>>, vector<8x1xf32>,
    } else {
    }
    %c0 = arith.constant 0 : index
    %c0_2 = arith.constant 0 : index
    %5 = vector.load %arg4[%c0, %c0_2] : memref<8x4xf32, #tpu.memory_space<vmem>>, vector<8x4xf32>
    %c0_3 = arith.constant 0 : index
    %c0_4 = arith.constant 0 : index
    %c0_5 = arith.constant 0 : index
    %6 = vector.load %arg2[%c0_3, %c0_4, %c0_5] : memref<1x4x144xf32, #tpu.memory_space<vmem>>, vector<1x4x144xf32>
    %7 = vector.shape_cast %6 : vector<1x4x144xf32> to vector<4x144xf32>
    %cst = arith.constant dense<0.000000e+00> : vector<8x144xf32>
    %8 = tpu.matmul %5, %7, %cst {dimension_numbers = #tpu.dot_dimension_numbers<[1], [0], [0], [1], [0, 0, 1, 1], [], []>} : vector<8x4xf32>, vector<4x144xf32>, vector<8x144xf32> -> vector<8x144xf32>
    %c0_6 = arith.constant 0 : index
    %c0_7 = arith.constant 0 : index
    %9 = vector.load %arg5[%c0_6, %c0_7] : memref<8x4xf32, #tpu.memory_space<vmem>>, vector<8x4xf32>
    %c0_8 = arith.constant 0 : index
    %c0_9 = arith.constant 0 : index
    %c0_10 = arith.constant 0 : index
    %10 = vector.load %arg3[%c0_8, %c0_9, %c0_10] : memref<1x4x144xf32, #tpu.memory_space<vmem>>, vector<1x4x144xf32>
    %11 = vector.shape_cast %10 : vector<1x4x144xf32> to vector<4x144xf32>
    %cst_11 = arith.constant dense<0.000000e+00> : vector<8x144xf32>
    %12 = tpu.matmul %9, %11, %cst_11 {dimension_numbers = #tpu.dot_dimension_numbers<[1], [0], [0], [1], [0, 0, 1, 1], [], []>} : vector<8x4xf32>, vector<4x144xf32>, vector<8x144xf32> -> vector<8x144xf32>
    %13 = arith.addf %8, %12 : vector<8x144xf32>
    %c0_12 = arith.constant 0 : index
    %c0_13 = arith.constant 0 : index
    %14 = vector.load %arg6[%c0_12, %c0_13] : memref<8x1xf32, #tpu.memory_space<vmem>>, vector<8x1xf32>
    %cst_14 = arith.constant dense<0.000000e+00> : vector<8xf32>
    %15 = vector.multi_reduction <add>, %13, %cst_14 [1] : vector<8x144xf32> to vector<8xf32>
    %16 = vector.shape_cast %15 : vector<8xf32> to vector<8x1xf32>
    %17 = arith.addf %14, %16 : vector<8x1xf32>
    %c0_15 = arith.constant 0 : index
    %c0_16 = arith.constant 0 : index
    %18 = vector.load %arg6[%c0_15, %c0_16] : memref<8x1xf32, #tpu.memory_space<vmem>>, vector<8x1xf32>
    tpu.vector_store %arg6[%c0_15, %c0_16], %17 {strides = array<i32>} : memref<8x1xf32, #tpu.memory_space<vmem>>, vector<8x1xf32>,
    %c0_17 = arith.constant 0 : index
    %c0_18 = arith.constant 0 : index
    %19 = vector.load %arg7[%c0_17, %c0_18] : memref<8x1xf32, #tpu.memory_space<vmem>>, vector<8x1xf32>
    %20 = arith.mulf %13, %13 : vector<8x144xf32>
    %cst_19 = arith.constant dense<0.000000e+00> : vector<8xf32>
    %21 = vector.multi_reduction <add>, %20, %cst_19 [1] : vector<8x144xf32> to vector<8xf32>
    %22 = vector.shape_cast %21 : vector<8xf32> to vector<8x1xf32>
    %23 = arith.addf %19, %22 : vector<8x1xf32>
    %c0_20 = arith.constant 0 : index
    %c0_21 = arith.constant 0 : index
    %24 = vector.load %arg7[%c0_20, %c0_21] : memref<8x1xf32, #tpu.memory_space<vmem>>, vector<8x1xf32>
    tpu.vector_store %arg7[%c0_20, %c0_21], %23 {strides = array<i32>} : memref<8x1xf32, #tpu.memory_space<vmem>>, vector<8x1xf32>,
    return
  }
  func.func @transform_0(%arg0: i32, %arg1: i32) -> (i32, i32, i32) {
    %c0_i32 = arith.constant 0 : i32
    %c0_i32_0 = arith.constant 0 : i32
    return %arg0, %c0_i32, %arg1 : i32, i32, i32
  }
  func.func @transform_1(%arg0: i32, %arg1: i32) -> (i32, i32, i32) {
    %c0_i32 = arith.constant 0 : i32
    %c0_i32_0 = arith.constant 0 : i32
    return %arg0, %c0_i32, %arg1 : i32, i32, i32
  }
  func.func @transform_2(%arg0: i32, %arg1: i32) -> (i32, i32) {
    %c0_i32 = arith.constant 0 : i32
    %c0_i32_0 = arith.constant 0 : i32
    %c0_i32_1 = arith.constant 0 : i32
    return %c0_i32, %c0_i32_0 : i32, i32
  }
  func.func @transform_3(%arg0: i32, %arg1: i32) -> (i32, i32) {
    %c0_i32 = arith.constant 0 : i32
    %c0_i32_0 = arith.constant 0 : i32
    %c0_i32_1 = arith.constant 0 : i32
    return %c0_i32, %c0_i32_0 : i32, i32
  }
  func.func @transform_4(%arg0: i32, %arg1: i32) -> (i32, i32) {
    %c0_i32 = arith.constant 0 : i32
    %c0_i32_0 = arith.constant 0 : i32
    %c0_i32_1 = arith.constant 0 : i32
    return %c0_i32, %c0_i32_0 : i32, i32
  }
  func.func @transform_5(%arg0: i32, %arg1: i32) -> (i32, i32) {
    %c0_i32 = arith.constant 0 : i32
    %c0_i32_0 = arith.constant 0 : i32
    %c0_i32_1 = arith.constant 0 : i32
    return %c0_i32, %c0_i32_0 : i32, i32
  }
}

module attributes {stable_mosaic.version = 11 : i64} {
  func.func @_apply_kernel(%arg0: i32, %arg1: i32, %arg2: memref<1x4x144xf32, #tpu.memory_space<vmem>>, %arg3: memref<1x4x144xf32, #tpu.memory_space<vmem>>, %arg4: memref<8x4xf32, #tpu.memory_space<vmem>>, %arg5: memref<8x4xf32, #tpu.memory_space<vmem>>, %arg6: memref<8x1xf32, #tpu.memory_space<vmem>>, %arg7: memref<8x1xf32, #tpu.memory_space<vmem>>, %arg8: memref<1x8x144xf32, #tpu.memory_space<vmem>>) attributes {dimension_semantics = [#tpu.dimension_semantics<parallel>, #tpu.dimension_semantics<parallel>], iteration_bounds = array<i64: 2, 1>, scalar_prefetch = 0 : i64, scratch_operands = 0 : i64, tpu.core_type = #tpu.core_type<tc>, window_params = [{transform_indices = @transform_0, window_bounds = array<i64: 1, 4, 144>}, {transform_indices = @transform_1, window_bounds = array<i64: 1, 4, 144>}, {pipeline_mode = #tpu.pipeline_mode<synchronous>, transform_indices = @transform_2, window_bounds = array<i64: 8, 4>}, {pipeline_mode = #tpu.pipeline_mode<synchronous>, transform_indices = @transform_3, window_bounds = array<i64: 8, 4>}, {pipeline_mode = #tpu.pipeline_mode<synchronous>, transform_indices = @transform_4, window_bounds = array<i64: 8, 1>}, {pipeline_mode = #tpu.pipeline_mode<synchronous>, transform_indices = @transform_5, window_bounds = array<i64: 8, 1>}, {transform_indices = @transform_6, window_bounds = array<i64: 1, 8, 144>}]} {
    %c0 = arith.constant 0 : index
    %c0_0 = arith.constant 0 : index
    %0 = vector.load %arg4[%c0, %c0_0] : memref<8x4xf32, #tpu.memory_space<vmem>>, vector<8x4xf32>
    %c0_1 = arith.constant 0 : index
    %c0_2 = arith.constant 0 : index
    %c0_3 = arith.constant 0 : index
    %1 = vector.load %arg2[%c0_1, %c0_2, %c0_3] : memref<1x4x144xf32, #tpu.memory_space<vmem>>, vector<1x4x144xf32>
    %2 = vector.shape_cast %1 : vector<1x4x144xf32> to vector<4x144xf32>
    %cst = arith.constant dense<0.000000e+00> : vector<8x144xf32>
    %3 = tpu.matmul %0, %2, %cst {dimension_numbers = #tpu.dot_dimension_numbers<[1], [0], [0], [1], [0, 0, 1, 1], [], []>} : vector<8x4xf32>, vector<4x144xf32>, vector<8x144xf32> -> vector<8x144xf32>
    %c0_4 = arith.constant 0 : index
    %c0_5 = arith.constant 0 : index
    %4 = vector.load %arg5[%c0_4, %c0_5] : memref<8x4xf32, #tpu.memory_space<vmem>>, vector<8x4xf32>
    %c0_6 = arith.constant 0 : index
    %c0_7 = arith.constant 0 : index
    %c0_8 = arith.constant 0 : index
    %5 = vector.load %arg3[%c0_6, %c0_7, %c0_8] : memref<1x4x144xf32, #tpu.memory_space<vmem>>, vector<1x4x144xf32>
    %6 = vector.shape_cast %5 : vector<1x4x144xf32> to vector<4x144xf32>
    %cst_9 = arith.constant dense<0.000000e+00> : vector<8x144xf32>
    %7 = tpu.matmul %4, %6, %cst_9 {dimension_numbers = #tpu.dot_dimension_numbers<[1], [0], [0], [1], [0, 0, 1, 1], [], []>} : vector<8x4xf32>, vector<4x144xf32>, vector<8x144xf32> -> vector<8x144xf32>
    %8 = arith.addf %3, %7 : vector<8x144xf32>
    %c0_10 = arith.constant 0 : index
    %c0_11 = arith.constant 0 : index
    %9 = vector.load %arg6[%c0_10, %c0_11] : memref<8x1xf32, #tpu.memory_space<vmem>>, vector<8x1xf32>
    %10 = vector.broadcast %9 : vector<8x1xf32> to vector<8x144xf32>
    %11 = arith.mulf %8, %10 : vector<8x144xf32>
    %c0_12 = arith.constant 0 : index
    %c0_13 = arith.constant 0 : index
    %12 = vector.load %arg7[%c0_12, %c0_13] : memref<8x1xf32, #tpu.memory_space<vmem>>, vector<8x1xf32>
    %13 = vector.broadcast %12 : vector<8x1xf32> to vector<8x144xf32>
    %14 = arith.addf %11, %13 : vector<8x144xf32>
    %cst_14 = arith.constant 0.000000e+00 : f32
    %15 = vector.broadcast %cst_14 : f32 to vector<8x144xf32>
    %16 = arith.maximumf %14, %15 : vector<8x144xf32>
    %c0_15 = arith.constant 0 : index
    %c0_16 = arith.constant 0 : index
    %c0_17 = arith.constant 0 : index
    %17 = vector.load %arg8[%c0_15, %c0_16, %c0_17] : memref<1x8x144xf32, #tpu.memory_space<vmem>>, vector<1x8x144xf32>
    %18 = vector.shape_cast %17 : vector<1x8x144xf32> to vector<8x144xf32>
    %19 = vector.shape_cast %16 : vector<8x144xf32> to vector<1x8x144xf32>
    tpu.vector_store %arg8[%c0_15, %c0_16, %c0_17], %19 {strides = array<i32>} : memref<1x8x144xf32, #tpu.memory_space<vmem>>, vector<1x8x144xf32>,
    return
  }
  func.func @transform_0(%arg0: i32, %arg1: i32) -> (i32, i32, i32) {
    %c0_i32 = arith.constant 0 : i32
    %c0_i32_0 = arith.constant 0 : i32
    return %arg0, %c0_i32, %arg1 : i32, i32, i32
  }
  func.func @transform_1(%arg0: i32, %arg1: i32) -> (i32, i32, i32) {
    %c0_i32 = arith.constant 0 : i32
    %c0_i32_0 = arith.constant 0 : i32
    return %arg0, %c0_i32, %arg1 : i32, i32, i32
  }
  func.func @transform_2(%arg0: i32, %arg1: i32) -> (i32, i32) {
    %c0_i32 = arith.constant 0 : i32
    %c0_i32_0 = arith.constant 0 : i32
    %c0_i32_1 = arith.constant 0 : i32
    return %c0_i32, %c0_i32_0 : i32, i32
  }
  func.func @transform_3(%arg0: i32, %arg1: i32) -> (i32, i32) {
    %c0_i32 = arith.constant 0 : i32
    %c0_i32_0 = arith.constant 0 : i32
    %c0_i32_1 = arith.constant 0 : i32
    return %c0_i32, %c0_i32_0 : i32, i32
  }
  func.func @transform_4(%arg0: i32, %arg1: i32) -> (i32, i32) {
    %c0_i32 = arith.constant 0 : i32
    %c0_i32_0 = arith.constant 0 : i32
    %c0_i32_1 = arith.constant 0 : i32
    return %c0_i32, %c0_i32_0 : i32, i32
  }
  func.func @transform_5(%arg0: i32, %arg1: i32) -> (i32, i32) {
    %c0_i32 = arith.constant 0 : i32
    %c0_i32_0 = arith.constant 0 : i32
    %c0_i32_1 = arith.constant 0 : i32
    return %c0_i32, %c0_i32_0 : i32, i32
  }
  func.func @transform_6(%arg0: i32, %arg1: i32) -> (i32, i32, i32) {
    %c0_i32 = arith.constant 0 : i32
    %c0_i32_0 = arith.constant 0 : i32
    return %arg0, %c0_i32, %arg1 : i32, i32, i32
  }
}

</mosaic_0001>

<llo_original>
// kernel: fourier_unit_forward.2
$region0: #{fourier_unit_forward.2}
  #allocation0 [shape = 'u32[]', space=smem, size = 0x4, offset = 0x4, fixed_abs, tag = 'smem constant byte address 0x4 - core index']
  #allocation1 [shape = 'u32[144,128]{1,0:T(1,128)}', space=vmem, size = 0x12000, scoped, tag = 'internal scratch']
  %s0 = inlined_call_operand.vmem [shape: f32[2,4,144], index: 0, kind: input, shape index: {}]
  %s1 = inlined_call_operand.vmem [shape: f32[2,4,144], index: 1, kind: input, shape index: {}]
  %s2 = inlined_call_operand.vmem [shape: f32[8,4], index: 2, kind: input, shape index: {}]
  %s3 = inlined_call_operand.vmem [shape: f32[8,4], index: 3, kind: input, shape index: {}]
  %s4 = inlined_call_operand.vmem [shape: f32[8,1], index: 4, kind: output, shape index: {0}]
  %s5 = inlined_call_operand.vmem [shape: f32[8,1], index: 5, kind: output, shape index: {1}]
  %6 = xla_tuple %s4, %s5
  %s7 = sld [smem:[#allocation0]]
  $region61: #{fourier_unit_forward.2} parent=0
    _
  %s9 = ssub.s32 1, %s7
  %s10 = scalar_select 0, %s9, %s7
  loop: start=0, step=1, limit=4
  $region2: #{fourier_unit_forward.2} parent=0 // loop_pre_header
    _
  $region3: #{fourier_unit_forward.2} parent=0 // loop_header
    %s12 = sphi 0, %s16
    %p13 = scmp.ge.s32.totalorder %s12, 4
    %s19 = sphi 0, %s31
    %s20 = sphi 0, %s27
    %s21 = sphi 0, %s19
    %s22 = sphi 0, %s20
    %s23 = sphi 0, %s21
    %s24 = sphi 0, %s22
    %s36 = sphi 0, %s38
    %s39 = sphi 0, %s36
    %s40 = sphi 0, %s39
    %s56 = sphi 0, %s40
    %s64 = sphi 0, %s66
    %s67 = sphi 0, %s64
    %s68 = sphi 0, %s67
    %s84 = sphi 0, %s68
    %s88 = sphi 0, %s88
    %s90 = sphi 0, %s88
    %s91 = sphi 0, %s90
    %s105 = sphi 0, %s91
    %s109 = sphi 0, %s109
    %s111 = sphi 0, %s109
    %s112 = sphi 0, %s111
    %s126 = sphi 0, %s112
    %s130 = sphi 0, %s130
    %s132 = sphi 0, %s130
    %s133 = sphi 0, %s132
    %s147 = sphi 0, %s133
    %s151 = sphi 0, %s151
    %s153 = sphi 0, %s151
    %s154 = sphi 0, %s153
    %s168 = sphi 0, %s154
  $region4: #{fourier_unit_forward.2} parent=0 // loop_header_branch
    %15 = sbr.rel (%p13) target = $region8
  $region5: #{fourier_unit_forward.2} parent=0 // loop_body
    %s17 = ssub.s32 %s12, 1
    %s18 = ssub.s32 %s12, 2
    %s25 = sadd.s32 1, %s20
    %p26 = scmp.ge.s32.totalorder %s25, 1
    %s27 = scalar_select %p26, 0, %s25
    %s28 = sadd.s32 1, %s19
    %s29 = scalar_select %p26, %s28, %s19
    %p30 = scmp.ge.s32.totalorder %s29, 2
    %s31 = scalar_select %p30, 0, %s29
    %s32 = ssub.s32 %s19, %s31
    %s33 = ssub.s32 %s20, %s27
    %s34 = sor.u32 %s32, %s33
    %p35 = scmp.eq.s32.totalorder %s34, 0
    %s37 = sadd.s32 %s36, 1
    %s38 = scalar_select %p35, %s36, %s37
    %p41 = pneg %p35
    %p42 = scmp.eq.s32.totalorder %s12, 1
    %p43 = por %p41, %p42
    %p44 = scmp.ne.s32.totalorder %s36, %s39
    %p45 = scmp.eq.s32.totalorder %s12, 0
    %p46 = por %p44, %p45
    %p47 = scmp.ne.s32.totalorder %s36, %s39
    %p48 = scmp.eq.s32.totalorder %s17, 1
    %p49 = por %p47, %p48
    %p50 = scmp.ne.s32.totalorder %s39, %s40
    %p51 = scmp.eq.s32.totalorder %s17, 0
    %p52 = por %p50, %p51
    %p53 = scmp.ne.s32.totalorder %s39, %s40
    %p54 = scmp.eq.s32.totalorder %s18, 1
    %p55 = por %p53, %p54
    %p57 = scmp.ne.s32.totalorder %s40, %s56
    %p58 = scmp.eq.s32.totalorder %s18, 0
    %p59 = por %p57, %p58
    %s60 = ssub.s32 %s19, %s31
    %s61 = ssub.s32 %s20, %s27
    %s62 = sor.u32 %s60, %s61
    %p63 = scmp.eq.s32.totalorder %s62, 0
    %s65 = sadd.s32 %s64, 1
    %s66 = scalar_select %p63, %s64, %s65
    %p69 = pneg %p63
    %p70 = scmp.eq.s32.totalorder %s12, 1
    %p71 = por %p69, %p70
    %p72 = scmp.ne.s32.totalorder %s64, %s67
    %p73 = scmp.eq.s32.totalorder %s12, 0
    %p74 = por %p72, %p73
    %p75 = scmp.ne.s32.totalorder %s64, %s67
    %p76 = scmp.eq.s32.totalorder %s17, 1
    %p77 = por %p75, %p76
    %p78 = scmp.ne.s32.totalorder %s67, %s68
    %p79 = scmp.eq.s32.totalorder %s17, 0
    %p80 = por %p78, %p79
    %p81 = scmp.ne.s32.totalorder %s67, %s68
    %p82 = scmp.eq.s32.totalorder %s18, 1
    %p83 = por %p81, %p82
    %p85 = scmp.ne.s32.totalorder %s68, %s84
    %p86 = scmp.eq.s32.totalorder %s18, 0
    %p87 = por %p85, %p86
    %s89 = sadd.s32 %s88, 1
    %p92 = scmp.eq.s32.totalorder %s12, 1
    %p93 = scmp.ne.s32.totalorder %s88, %s90
    %p94 = scmp.eq.s32.totalorder %s12, 0
    %p95 = por %p93, %p94
    %p96 = scmp.ne.s32.totalorder %s88, %s90
    %p97 = scmp.eq.s32.totalorder %s17, 1
    %p98 = por %p96, %p97
    %p99 = scmp.ne.s32.totalorder %s90, %s91
    %p100 = scmp.eq.s32.totalorder %s17, 0
    %p101 = por %p99, %p100
    %p102 = scmp.ne.s32.totalorder %s90, %s91
    %p103 = scmp.eq.s32.totalorder %s18, 1
    %p104 = por %p102, %p103
    %p106 = scmp.ne.s32.totalorder %s91, %s105
    %p107 = scmp.eq.s32.totalorder %s18, 0
    %p108 = por %p106, %p107
    %s110 = sadd.s32 %s109, 1
    %p113 = scmp.eq.s32.totalorder %s12, 1
    %p114 = scmp.ne.s32.totalorder %s109, %s111
    %p115 = scmp.eq.s32.totalorder %s12, 0
    %p116 = por %p114, %p115
    %p117 = scmp.ne.s32.totalorder %s109, %s111
    %p118 = scmp.eq.s32.totalorder %s17, 1
    %p119 = por %p117, %p118
    %p120 = scmp.ne.s32.totalorder %s111, %s112
    %p121 = scmp.eq.s32.totalorder %s17, 0
    %p122 = por %p120, %p121
    %p123 = scmp.ne.s32.totalorder %s111, %s112
    %p124 = scmp.eq.s32.totalorder %s18, 1
    %p125 = por %p123, %p124
    %p127 = scmp.ne.s32.totalorder %s112, %s126
    %p128 = scmp.eq.s32.totalorder %s18, 0
    %p129 = por %p127, %p128
    %s131 = sadd.s32 %s130, 1
    %p134 = scmp.eq.s32.totalorder %s12, 1
    %p135 = scmp.ne.s32.totalorder %s130, %s132
    %p136 = scmp.eq.s32.totalorder %s12, 0
    %p137 = por %p135, %p136
    %p138 = scmp.ne.s32.totalorder %s130, %s132
    %p139 = scmp.eq.s32.totalorder %s17, 1
    %p140 = por %p138, %p139
    %p141 = scmp.ne.s32.totalorder %s132, %s133
    %p142 = scmp.eq.s32.totalorder %s17, 0
    %p143 = por %p141, %p142
    %p144 = scmp.ne.s32.totalorder %s132, %s133
    %p145 = scmp.eq.s32.totalorder %s18, 1
    %p146 = por %p144, %p145
    %p148 = scmp.ne.s32.totalorder %s133, %s147
    %p149 = scmp.eq.s32.totalorder %s18, 0
    %p150 = por %p148, %p149
    %s152 = sadd.s32 %s151, 1
    %p155 = scmp.eq.s32.totalorder %s12, 1
    %p156 = scmp.ne.s32.totalorder %s151, %s153
    %p157 = scmp.eq.s32.totalorder %s12, 0
    %p158 = por %p156, %p157
    %p159 = scmp.ne.s32.totalorder %s151, %s153
    %p160 = scmp.eq.s32.totalorder %s17, 1
    %p161 = por %p159, %p160
    %p162 = scmp.ne.s32.totalorder %s153, %s154
    %p163 = scmp.eq.s32.totalorder %s17, 0
    %p164 = por %p162, %p163
    %p165 = scmp.ne.s32.totalorder %s153, %s154
    %p166 = scmp.eq.s32.totalorder %s18, 1
    %p167 = por %p165, %p166
    %p169 = scmp.ne.s32.totalorder %s154, %s168
    %p170 = scmp.eq.s32.totalorder %s18, 0
    %p171 = por %p169, %p170
    %p172 = scmp.le.s32.totalorder 1, %s12
    %p173 = scmp.lt.s32.totalorder %s12, 3
    %p174 = pnand %p172, %p173
    %p175 = pneg %p174
    // Predicated region
    $region9: #{fourier_unit_forward.2} parent=5 // pred_check
      _
    $region10: #{fourier_unit_forward.2} parent=5 // pred_check_branch
      %177 = sbr.rel (%p174) target = $region12
    $region11: #{fourier_unit_forward.2} parent=5 // pred_region
      %s178 = ssub.s32 %s12, 1
      // Predicated region
      $region13: #{fourier_unit_forward.2} parent=11 // pred_check
        %p179 = pneg %p101
      $region14: #{fourier_unit_forward.2} parent=11 // pred_check_branch
        %181 = sbr.rel (%p179) target = $region16
      $region15: #{fourier_unit_forward.2} parent=11 // pred_region
        _
      $region16: #{fourier_unit_forward.2} parent=11 // pred_fallthru
        _
      // Predicated region
      $region17: #{fourier_unit_forward.2} parent=11 // pred_check
        %p182 = pneg %p122
      $region18: #{fourier_unit_forward.2} parent=11 // pred_check_branch
        %184 = sbr.rel (%p182) target = $region20
      $region19: #{fourier_unit_forward.2} parent=11 // pred_region
        _
      $region20: #{fourier_unit_forward.2} parent=11 // pred_fallthru
        _
    $region12: #{fourier_unit_forward.2} parent=5 // pred_fallthru
      _
    %p185 = scmp.lt.s32.totalorder %s12, 2
    // Predicated region
    $region21: #{fourier_unit_forward.2} parent=5 // pred_check
      %p186 = pneg %p185
    $region22: #{fourier_unit_forward.2} parent=5 // pred_check_branch
      %188 = sbr.rel (%p186) target = $region24
    $region23: #{fourier_unit_forward.2} parent=5 // pred_region
      // Predicated region
      $region25: #{fourier_unit_forward.2} parent=23 // pred_check
        %p189 = pneg %p46
      $region26: #{fourier_unit_forward.2} parent=23 // pred_check_branch
        %191 = sbr.rel (%p189) target = $region28
      $region27: #{fourier_unit_forward.2} parent=23 // pred_region
        %s192 = smul.u32 2, %s20
        %p193 = scmp.lt.s32.totalorder %s19, 1
        %s194 = scalar_select %p193, %s19, 1
        %p195 = scmp.lt.s32.totalorder %s192, 1
        %s196 = scalar_select %p195, %s192, 1
        %s197 = smul.addr %s194, 2
        %s198 = sadd.s32 %s196, %s197
        %s199 = smul.addr %s198, 4
        %s200 = scalar_lea.vmem %s0, %s199
        %s201 = smul.u32 2, %s20
      $region28: #{fourier_unit_forward.2} parent=23 // pred_fallthru
        _
      // Predicated region
      $region29: #{fourier_unit_forward.2} parent=23 // pred_check
        %p202 = pneg %p74
      $region30: #{fourier_unit_forward.2} parent=23 // pred_check_branch
        %204 = sbr.rel (%p202) target = $region32
      $region31: #{fourier_unit_forward.2} parent=23 // pred_region
        %s205 = smul.u32 2, %s20
        %p206 = scmp.lt.s32.totalorder %s19, 1
        %s207 = scalar_select %p206, %s19, 1
        %p208 = scmp.lt.s32.totalorder %s205, 1
        %s209 = scalar_select %p208, %s205, 1
        %s210 = smul.addr %s207, 2
        %s211 = sadd.s32 %s209, %s210
        %s212 = smul.addr %s211, 4
        %s213 = scalar_lea.vmem %s1, %s212
        %s214 = smul.u32 2, %s20
      $region32: #{fourier_unit_forward.2} parent=23 // pred_fallthru
        _
    $region24: #{fourier_unit_forward.2} parent=5 // pred_fallthru
      _
    %p215 = scmp.le.s32.totalorder 1, %s12
    %p216 = scmp.lt.s32.totalorder %s12, 3
    %p217 = pnand %p215, %p216
    %p218 = pneg %p217
    // Predicated region
    $region33: #{fourier_unit_forward.2} parent=5 // pred_check
      _
    $region34: #{fourier_unit_forward.2} parent=5 // pred_check_branch
      %220 = sbr.rel (%p217) target = $region36
    $region35: #{fourier_unit_forward.2} parent=5 // pred_region
      %s221 = ssub.s32 %s12, 1
      %s222 = smul.u32 2, %s22
      %p223 = scmp.lt.s32.totalorder %s21, 1
      %s224 = scalar_select %p223, %s21, 1
      %p225 = scmp.lt.s32.totalorder %s222, 1
      %s226 = scalar_select %p225, %s222, 1
      %s227 = smul.addr %s224, 2
      %s228 = sadd.s32 %s226, %s227
      %s229 = smul.addr %s228, 4
      %s230 = scalar_lea.vmem %s0, %s229
      %p231 = pneg %p52
      %p232 = pneg %p49
      %s233 = smul.u32 2, %s22
      %p234 = scmp.lt.s32.totalorder %s21, 1
      %s235 = scalar_select %p234, %s21, 1
      %p236 = scmp.lt.s32.totalorder %s233, 1
      %s237 = scalar_select %p236, %s233, 1
      %s238 = smul.addr %s235, 2
      %s239 = sadd.s32 %s237, %s238
      %s240 = smul.addr %s239, 4
      %s241 = scalar_lea.vmem %s1, %s240
      %p242 = pneg %p80
      %p243 = pneg %p77
      %p244 = pneg %p101
      %p245 = pneg %p98
      %p246 = pneg %p122
      %p247 = pneg %p119
      %p248 = pneg %p143
      %p249 = pneg %p140
      %p250 = pneg %p164
      %p251 = pneg %p161
      %s252 = smul.u32 2, %s22
      %p253 = scmp.lt.s32.totalorder %s21, 1
      %s254 = scalar_select %p253, %s21, 1
      %p255 = scmp.lt.s32.totalorder %s252, 1
      %s256 = scalar_select %p255, %s252, 1
      %s257 = smul.addr %s254, 2
      %s258 = sadd.s32 %s256, %s257
      %s259 = smul.addr %s258, 4
      %s260 = scalar_lea.vmem %s0, %s259
      %s261 = smul.u32 2, %s22
      %s262 = smul.u32 2, %s22
      %p263 = scmp.lt.s32.totalorder %s21, 1
      %s264 = scalar_select %p263, %s21, 1
      %p265 = scmp.lt.s32.totalorder %s262, 1
      %s266 = scalar_select %p265, %s262, 1
      %s267 = smul.addr %s264, 2
      %s268 = sadd.s32 %s266, %s267
      %s269 = smul.addr %s268, 4
      %s270 = scalar_lea.vmem %s1, %s269
      %s271 = smul.u32 2, %s22
      %p272 = scmp.eq.s32.totalorder %s21, 0
      %p273 = scmp.eq.s32.totalorder %s22, 0
      %p274 = pnand %p272, %p273
      %p275 = pneg %p274
      // Predicated region
      $region37: #{fourier_unit_forward.2} parent=35 // pred_check
        _
      $region38: #{fourier_unit_forward.2} parent=35 // pred_check_branch
        %277 = sbr.rel (%p274) target = $region40
      $region39: #{fourier_unit_forward.2} parent=35 // pred_region
        %vm278 = vcmask 7168
        %279 = vst.msk [vmem:[%s4] sm:$0xff] %vm278, 0.0
        %280 = vst.msk [vmem:[%s5] sm:$0xff] %vm278, 0.0
      $region40: #{fourier_unit_forward.2} parent=35 // pred_fallthru
        _
      %v281 = vld [vmem:[%s2] sm:$0xff]
      %v282 = vld [vmem:[%s260] sm:$0xff]
      %v283 = vld [vmem:[%s3] sm:$0xff]
      %v284 = vld [vmem:[%s270] sm:$0xff]
      %v286 = vcombine.high %v284, %v284
      %vm287 = vcmask 31744
      %v289 = vsel %vm287, %v283, 0
      %vm291 = vcmask 1043456
      %v292 = vsel %vm291, %v284, 0
      %v294 = vsel %vm291, %v286, 0
      %296 = vmatprep.subr.mxu0 %v294
      %297 = vmatpush1.msra.mxu0 %v292
      %298 = vmatprep.subr.mxu0 0.0
      %299 = vmatpush1.msra.mxu0 0.0
      %300 = vmatprep.subr.mxu0 0.0
      %301 = vmatpush1.msra.mxu0 0.0
      %302 = vmatprep.subr.mxu0 0.0
      %303 = vmatpush1.msra.mxu0 0.0
      %304 = vmatprep.subr.mxu0 0.0
      %305 = vmatpush1.msra.mxu0 0.0
      %306 = vmatprep.subr.mxu0 0.0
      %307 = vmatpush1.msra.mxu0 0.0
      %308 = vmatprep.subr.mxu0 0.0
      %309 = vmatpush1.msra.mxu0 0.0
      %310 = vmatprep.subr.mxu0 0.0
      %311 = vmatpush1.msra.mxu0 0.0
      %312 = vmatprep.subr.mxu0 0.0
      %313 = vmatpush1.msra.mxu0 0.0
      %314 = vmatprep.subr.mxu0 0.0
      %315 = vmatpush1.msra.mxu0 0.0
      %316 = vmatprep.subr.mxu0 0.0
      %317 = vmatpush1.msra.mxu0 0.0
      %318 = vmatprep.subr.mxu0 0.0
      %319 = vmatpush1.msra.mxu0 0.0
      %320 = vmatprep.subr.mxu0 0.0
      %321 = vmatpush1.msra.mxu0 0.0
      %322 = vmatprep.subr.mxu0 0.0
      %323 = vmatpush1.msra.mxu0 0.0
      %324 = vmatprep.subr.mxu0 0.0
      %325 = vmatpush1.msra.mxu0 0.0
      %326 = vmatprep.subr.mxu0 0.0
      %327 = vmatpush1.msra.mxu0 0.0
      %328 = vmatprep.subr.mxu0 0.0
      %329 = vmatpush1.msra.mxu0 0.0
      %330 = vmatprep.subr.mxu0 0.0
      %331 = vmatpush1.msra.mxu0 0.0
      %332 = vmatprep.subr.mxu0 0.0
      %333 = vmatpush1.msra.mxu0 0.0
      %334 = vmatprep.subr.mxu0 0.0
      %335 = vmatpush1.msra.mxu0 0.0
      %336 = vmatprep.subr.mxu0 0.0
      %337 = vmatpush1.msra.mxu0 0.0
      %338 = vmatprep.subr.mxu0 0.0
      %339 = vmatpush1.msra.mxu0 0.0
      %340 = vmatprep.subr.mxu0 0.0
      %341 = vmatpush1.msra.mxu0 0.0
      %342 = vmatprep.subr.mxu0 0.0
      %343 = vmatpush1.msra.mxu0 0.0
      %344 = vmatprep.subr.mxu0 0.0
      %345 = vmatpush1.msra.mxu0 0.0
      %346 = vmatprep.subr.mxu0 0.0
      %347 = vmatpush1.msra.mxu0 0.0
      %348 = vmatprep.subr.mxu0 0.0
      %349 = vmatpush1.msra.mxu0 0.0
      %350 = vmatprep.subr.mxu0 0.0
      %351 = vmatpush1.msra.mxu0 0.0
      %352 = vmatprep.subr.mxu0 0.0
      %353 = vmatpush1.msra.mxu0 0.0
      %354 = vmatprep.subr.mxu0 0.0
      %355 = vmatpush1.msra.mxu0 0.0
      %356 = vmatprep.subr.mxu0 0.0
      %357 = vmatpush1.msra.mxu0 0.0
      %358 = vmatprep.subr.mxu0 0.0
      %359 = vmatpush1.msra.mxu0 0.0
      %360 = vmatprep.mubr.f32.mxu0 0.0
      %361 = vmatmul.mubr.f32.gmra.mrb[0].mxu0 %v289
      %v362 = vpop.f32.mrb[0].mxu0
      %v363 = vadd.f32 0.0, %v362
      %v364 = vpop.f32.mrb[0].mxu0
      %v365 = vadd.f32 0.0, %v364
      %366 = vdwg.mxu0
      %v368 = vcombine.high %v282, %v282
      %v370 = vsel %vm287, %v281, 0
      %v372 = vsel %vm291, %v282, 0
      %v374 = vsel %vm291, %v368, 0
      %376 = vmatprep.subr.mxu0 %v374
      %377 = vmatpush1.msra.mxu0 %v372
      %378 = vmatprep.subr.mxu0 0.0
      %379 = vmatpush1.msra.mxu0 0.0
      %380 = vmatprep.subr.mxu0 0.0
      %381 = vmatpush1.msra.mxu0 0.0
      %382 = vmatprep.subr.mxu0 0.0
      %383 = vmatpush1.msra.mxu0 0.0
      %384 = vmatprep.subr.mxu0 0.0
      %385 = vmatpush1.msra.mxu0 0.0
      %386 = vmatprep.subr.mxu0 0.0
      %387 = vmatpush1.msra.mxu0 0.0
      %388 = vmatprep.subr.mxu0 0.0
      %389 = vmatpush1.msra.mxu0 0.0
      %390 = vmatprep.subr.mxu0 0.0
      %391 = vmatpush1.msra.mxu0 0.0
      %392 = vmatprep.subr.mxu0 0.0
      %393 = vmatpush1.msra.mxu0 0.0
      %394 = vmatprep.subr.mxu0 0.0
      %395 = vmatpush1.msra.mxu0 0.0
      %396 = vmatprep.subr.mxu0 0.0
      %397 = vmatpush1.msra.mxu0 0.0
      %398 = vmatprep.subr.mxu0 0.0
      %399 = vmatpush1.msra.mxu0 0.0
      %400 = vmatprep.subr.mxu0 0.0
      %401 = vmatpush1.msra.mxu0 0.0
      %402 = vmatprep.subr.mxu0 0.0
      %403 = vmatpush1.msra.mxu0 0.0
      %404 = vmatprep.subr.mxu0 0.0
      %405 = vmatpush1.msra.mxu0 0.0
      %406 = vmatprep.subr.mxu0 0.0
      %407 = vmatpush1.msra.mxu0 0.0
      %408 = vmatprep.subr.mxu0 0.0
      %409 = vmatpush1.msra.mxu0 0.0
      %410 = vmatprep.subr.mxu0 0.0
      %411 = vmatpush1.msra.mxu0 0.0
      %412 = vmatprep.subr.mxu0 0.0
      %413 = vmatpush1.msra.mxu0 0.0
      %414 = vmatprep.subr.mxu0 0.0
      %415 = vmatpush1.msra.mxu0 0.0
      %416 = vmatprep.subr.mxu0 0.0
      %417 = vmatpush1.msra.mxu0 0.0
      %418 = vmatprep.subr.mxu0 0.0
      %419 = vmatpush1.msra.mxu0 0.0
      %420 = vmatprep.subr.mxu0 0.0
      %421 = vmatpush1.msra.mxu0 0.0
      %422 = vmatprep.subr.mxu0 0.0
      %423 = vmatpush1.msra.mxu0 0.0
      %424 = vmatprep.subr.mxu0 0.0
      %425 = vmatpush1.msra.mxu0 0.0
      %426 = vmatprep.subr.mxu0 0.0
      %427 = vmatpush1.msra.mxu0 0.0
      %428 = vmatprep.subr.mxu0 0.0
      %429 = vmatpush1.msra.mxu0 0.0
      %430 = vmatprep.subr.mxu0 0.0
      %431 = vmatpush1.msra.mxu0 0.0
      %432 = vmatprep.subr.mxu0 0.0
      %433 = vmatpush1.msra.mxu0 0.0
      %434 = vmatprep.subr.mxu0 0.0
      %435 = vmatpush1.msra.mxu0 0.0
      %436 = vmatprep.subr.mxu0 0.0
      %437 = vmatpush1.msra.mxu0 0.0
      %438 = vmatprep.subr.mxu0 0.0
      %439 = vmatpush1.msra.mxu0 0.0
      %440 = vmatprep.mubr.f32.mxu0 0.0
      %441 = vmatmul.mubr.f32.gmra.mrb[0].mxu0 %v370
      %v442 = vpop.f32.mrb[0].mxu0
      %v443 = vadd.f32 %v363, %v442
      %v444 = vpop.f32.mrb[0].mxu0
      %v445 = vadd.f32 %v365, %v444
      %446 = vdwg.mxu0
      %v447 = vld [vmem:[%s4] sm:$0xff]
      %vm448 = vcmask 130048
      %v449 = vsel %vm448, %v445, 0.0
      %v450 = vadd.f32 %v443, %v449
      %451 = vadd.xlane.f32.xlu0 %v450
      %v452 = vpop.xlane.xlu0 %451
      %v453 = vadd.f32 %v447, %v452
      %vm454 = vcmask 7168
      %455 = vst.msk [vmem:[%s4] sm:$0xff] %vm454, %v453
      %v456 = vld [vmem:[%s5] sm:$0xff]
      %v457 = vmul.f32 %v443, %v443
      %v458 = vmul.f32 %v445, %v445
      %v459 = vsel %vm448, %v458, 0.0
      %v460 = vadd.f32 %v457, %v459
      %461 = vadd.xlane.f32.xlu0 %v460
      %v462 = vpop.xlane.xlu0 %461
      %v463 = vadd.f32 %v456, %v462
      %464 = vst.msk [vmem:[%s5] sm:$0xff] %vm454, %v463
      // Predicated region
      $region41: #{fourier_unit_forward.2} parent=35 // pred_check
        %p465 = pneg %p140
      $region42: #{fourier_unit_forward.2} parent=35 // pred_check_branch
        %467 = sbr.rel (%p465) target = $region44
      $region43: #{fourier_unit_forward.2} parent=35 // pred_region
        _
      $region44: #{fourier_unit_forward.2} parent=35 // pred_fallthru
        _
      // Predicated region
      $region45: #{fourier_unit_forward.2} parent=35 // pred_check
        %p468 = pneg %p161
      $region46: #{fourier_unit_forward.2} parent=35 // pred_check_branch
        %470 = sbr.rel (%p468) target = $region48
      $region47: #{fourier_unit_forward.2} parent=35 // pred_region
        _
      $region48: #{fourier_unit_forward.2} parent=35 // pred_fallthru
        _
      // Predicated region
      $region49: #{fourier_unit_forward.2} parent=35 // pred_check
        %p471 = pneg %p140
      $region50: #{fourier_unit_forward.2} parent=35 // pred_check_branch
        %473 = sbr.rel (%p471) target = $region52
      $region51: #{fourier_unit_forward.2} parent=35 // pred_region
        _
      $region52: #{fourier_unit_forward.2} parent=35 // pred_fallthru
        _
      // Predicated region
      $region53: #{fourier_unit_forward.2} parent=35 // pred_check
        %p474 = pneg %p161
      $region54: #{fourier_unit_forward.2} parent=35 // pred_check_branch
        %476 = sbr.rel (%p474) target = $region56
      $region55: #{fourier_unit_forward.2} parent=35 // pred_region
        _
      $region56: #{fourier_unit_forward.2} parent=35 // pred_fallthru
        _
    $region36: #{fourier_unit_forward.2} parent=5 // pred_fallthru
      _
    %p477 = scmp.le.s32.totalorder 2, %s12
    // Predicated region
    $region57: #{fourier_unit_forward.2} parent=5 // pred_check
      %p478 = pneg %p477
    $region58: #{fourier_unit_forward.2} parent=5 // pred_check_branch
      %480 = sbr.rel (%p478) target = $region60
    $region59: #{fourier_unit_forward.2} parent=5 // pred_region
      %s481 = ssub.s32 %s12, 2
    $region60: #{fourier_unit_forward.2} parent=5 // pred_fallthru
      _
  $region6: #{fourier_unit_forward.2} parent=0 // loop_footer
    %s16 = sadd.s32 1, %s12
  $region7: #{fourier_unit_forward.2} parent=0 // loop_footer_branch
    %11 = sbr.rel target = $region3
  $region8: #{fourier_unit_forward.2} parent=0 // loop_exit
    _

// kernel: fourier_unit_forward.3
$region0: #{fourier_unit_forward.3}
  #allocation0 [shape = 'u32[]', space=smem, size = 0x4, offset = 0x4, fixed_abs, tag = 'smem constant byte address 0x4 - core index']
  #allocation1 [shape = 'u32[144,128]{1,0:T(1,128)}', space=vmem, size = 0x12000, scoped, tag = 'internal scratch']
  %s0 = inlined_call_operand.vmem [shape: f32[2,4,144], index: 0, kind: input, shape index: {}]
  %s1 = inlined_call_operand.vmem [shape: f32[2,4,144], index: 1, kind: input, shape index: {}]
  %s2 = inlined_call_operand.vmem [shape: f32[8,4], index: 2, kind: input, shape index: {}]
  %s3 = inlined_call_operand.vmem [shape: f32[8,4], index: 3, kind: input, shape index: {}]
  %s4 = inlined_call_operand.vmem [shape: f32[8,1], index: 4, kind: input, shape index: {}]
  %s5 = inlined_call_operand.vmem [shape: f32[8,1], index: 5, kind: input, shape index: {}]
  %s6 = inlined_call_operand.vmem [shape: f32[2,8,144], index: 6, kind: output, shape index: {}]
  %s7 = sld [smem:[#allocation0]]
  $region57: #{fourier_unit_forward.3} parent=0
    _
  %s9 = ssub.s32 1, %s7
  %s10 = scalar_select 0, %s9, %s7
  loop: start=0, step=1, limit=4
  $region2: #{fourier_unit_forward.3} parent=0 // loop_pre_header
    _
  $region3: #{fourier_unit_forward.3} parent=0 // loop_header
    %s12 = sphi 0, %s16
    %p13 = scmp.ge.s32.totalorder %s12, 4
    %s19 = sphi 0, %s31
    %s20 = sphi 0, %s27
    %s21 = sphi 0, %s19
    %s22 = sphi 0, %s20
    %s23 = sphi 0, %s21
    %s24 = sphi 0, %s22
    %s36 = sphi 0, %s38
    %s39 = sphi 0, %s36
    %s40 = sphi 0, %s39
    %s56 = sphi 0, %s40
    %s64 = sphi 0, %s66
    %s67 = sphi 0, %s64
    %s68 = sphi 0, %s67
    %s84 = sphi 0, %s68
    %s88 = sphi 0, %s88
    %s90 = sphi 0, %s88
    %s91 = sphi 0, %s90
    %s105 = sphi 0, %s91
    %s109 = sphi 0, %s109
    %s111 = sphi 0, %s109
    %s112 = sphi 0, %s111
    %s126 = sphi 0, %s112
    %s130 = sphi 0, %s130
    %s132 = sphi 0, %s130
    %s133 = sphi 0, %s132
    %s147 = sphi 0, %s133
    %s151 = sphi 0, %s151
    %s153 = sphi 0, %s151
    %s154 = sphi 0, %s153
    %s168 = sphi 0, %s154
    %s176 = sphi 0, %s178
    %s179 = sphi 0, %s176
    %s180 = sphi 0, %s179
    %s196 = sphi 0, %s180
  $region4: #{fourier_unit_forward.3} parent=0 // loop_header_branch
    %15 = sbr.rel (%p13) target = $region8
  $region5: #{fourier_unit_forward.3} parent=0 // loop_body
    %s17 = ssub.s32 %s12, 1
    %s18 = ssub.s32 %s12, 2
    %s25 = sadd.s32 1, %s20
    %p26 = scmp.ge.s32.totalorder %s25, 1
    %s27 = scalar_select %p26, 0, %s25
    %s28 = sadd.s32 1, %s19
    %s29 = scalar_select %p26, %s28, %s19
    %p30 = scmp.ge.s32.totalorder %s29, 2
    %s31 = scalar_select %p30, 0, %s29
    %s32 = ssub.s32 %s19, %s31
    %s33 = ssub.s32 %s20, %s27
    %s34 = sor.u32 %s32, %s33
    %p35 = scmp.eq.s32.totalorder %s34, 0
    %s37 = sadd.s32 %s36, 1
    %s38 = scalar_select %p35, %s36, %s37
    %p41 = pneg %p35
    %p42 = scmp.eq.s32.totalorder %s12, 1
    %p43 = por %p41, %p42
    %p44 = scmp.ne.s32.totalorder %s36, %s39
    %p45 = scmp.eq.s32.totalorder %s12, 0
    %p46 = por %p44, %p45
    %p47 = scmp.ne.s32.totalorder %s36, %s39
    %p48 = scmp.eq.s32.totalorder %s17, 1
    %p49 = por %p47, %p48
    %p50 = scmp.ne.s32.totalorder %s39, %s40
    %p51 = scmp.eq.s32.totalorder %s17, 0
    %p52 = por %p50, %p51
    %p53 = scmp.ne.s32.totalorder %s39, %s40
    %p54 = scmp.eq.s32.totalorder %s18, 1
    %p55 = por %p53, %p54
    %p57 = scmp.ne.s32.totalorder %s40, %s56
    %p58 = scmp.eq.s32.totalorder %s18, 0
    %p59 = por %p57, %p58
    %s60 = ssub.s32 %s19, %s31
    %s61 = ssub.s32 %s20, %s27
    %s62 = sor.u32 %s60, %s61
    %p63 = scmp.eq.s32.totalorder %s62, 0
    %s65 = sadd.s32 %s64, 1
    %s66 = scalar_select %p63, %s64, %s65
    %p69 = pneg %p63
    %p70 = scmp.eq.s32.totalorder %s12, 1
    %p71 = por %p69, %p70
    %p72 = scmp.ne.s32.totalorder %s64, %s67
    %p73 = scmp.eq.s32.totalorder %s12, 0
    %p74 = por %p72, %p73
    %p75 = scmp.ne.s32.totalorder %s64, %s67
    %p76 = scmp.eq.s32.totalorder %s17, 1
    %p77 = por %p75, %p76
    %p78 = scmp.ne.s32.totalorder %s67, %s68
    %p79 = scmp.eq.s32.totalorder %s17, 0
    %p80 = por %p78, %p79
    %p81 = scmp.ne.s32.totalorder %s67, %s68
    %p82 = scmp.eq.s32.totalorder %s18, 1
    %p83 = por %p81, %p82
    %p85 = scmp.ne.s32.totalorder %s68, %s84
    %p86 = scmp.eq.s32.totalorder %s18, 0
    %p87 = por %p85, %p86
    %s89 = sadd.s32 %s88, 1
    %p92 = scmp.eq.s32.totalorder %s12, 1
    %p93 = scmp.ne.s32.totalorder %s88, %s90
    %p94 = scmp.eq.s32.totalorder %s12, 0
    %p95 = por %p93, %p94
    %p96 = scmp.ne.s32.totalorder %s88, %s90
    %p97 = scmp.eq.s32.totalorder %s17, 1
    %p98 = por %p96, %p97
    %p99 = scmp.ne.s32.totalorder %s90, %s91
    %p100 = scmp.eq.s32.totalorder %s17, 0
    %p101 = por %p99, %p100
    %p102 = scmp.ne.s32.totalorder %s90, %s91
    %p103 = scmp.eq.s32.totalorder %s18, 1
    %p104 = por %p102, %p103
    %p106 = scmp.ne.s32.totalorder %s91, %s105
    %p107 = scmp.eq.s32.totalorder %s18, 0
    %p108 = por %p106, %p107
    %s110 = sadd.s32 %s109, 1
    %p113 = scmp.eq.s32.totalorder %s12, 1
    %p114 = scmp.ne.s32.totalorder %s109, %s111
    %p115 = scmp.eq.s32.totalorder %s12, 0
    %p116 = por %p114, %p115
    %p117 = scmp.ne.s32.totalorder %s109, %s111
    %p118 = scmp.eq.s32.totalorder %s17, 1
    %p119 = por %p117, %p118
    %p120 = scmp.ne.s32.totalorder %s111, %s112
    %p121 = scmp.eq.s32.totalorder %s17, 0
    %p122 = por %p120, %p121
    %p123 = scmp.ne.s32.totalorder %s111, %s112
    %p124 = scmp.eq.s32.totalorder %s18, 1
    %p125 = por %p123, %p124
    %p127 = scmp.ne.s32.totalorder %s112, %s126
    %p128 = scmp.eq.s32.totalorder %s18, 0
    %p129 = por %p127, %p128
    %s131 = sadd.s32 %s130, 1
    %p134 = scmp.eq.s32.totalorder %s12, 1
    %p135 = scmp.ne.s32.totalorder %s130, %s132
    %p136 = scmp.eq.s32.totalorder %s12, 0
    %p137 = por %p135, %p136
    %p138 = scmp.ne.s32.totalorder %s130, %s132
    %p139 = scmp.eq.s32.totalorder %s17, 1
    %p140 = por %p138, %p139
    %p141 = scmp.ne.s32.totalorder %s132, %s133
    %p142 = scmp.eq.s32.totalorder %s17, 0
    %p143 = por %p141, %p142
    %p144 = scmp.ne.s32.totalorder %s132, %s133
    %p145 = scmp.eq.s32.totalorder %s18, 1
    %p146 = por %p144, %p145
    %p148 = scmp.ne.s32.totalorder %s133, %s147
    %p149 = scmp.eq.s32.totalorder %s18, 0
    %p150 = por %p148, %p149
    %s152 = sadd.s32 %s151, 1
    %p155 = scmp.eq.s32.totalorder %s12, 1
    %p156 = scmp.ne.s32.totalorder %s151, %s153
    %p157 = scmp.eq.s32.totalorder %s12, 0
    %p158 = por %p156, %p157
    %p159 = scmp.ne.s32.totalorder %s151, %s153
    %p160 = scmp.eq.s32.totalorder %s17, 1
    %p161 = por %p159, %p160
    %p162 = scmp.ne.s32.totalorder %s153, %s154
    %p163 = scmp.eq.s32.totalorder %s17, 0
    %p164 = por %p162, %p163
    %p165 = scmp.ne.s32.totalorder %s153, %s154
    %p166 = scmp.eq.s32.totalorder %s18, 1
    %p167 = por %p165, %p166
    %p169 = scmp.ne.s32.totalorder %s154, %s168
    %p170 = scmp.eq.s32.totalorder %s18, 0
    %p171 = por %p169, %p170
    %s172 = ssub.s32 %s19, %s31
    %s173 = ssub.s32 %s20, %s27
    %s174 = sor.u32 %s172, %s173
    %p175 = scmp.eq.s32.totalorder %s174, 0
    %s177 = sadd.s32 %s176, 1
    %s178 = scalar_select %p175, %s176, %s177
    %p181 = pneg %p175
    %p182 = scmp.eq.s32.totalorder %s12, 1
    %p183 = por %p181, %p182
    %p184 = scmp.ne.s32.totalorder %s176, %s179
    %p185 = scmp.eq.s32.totalorder %s12, 0
    %p186 = por %p184, %p185
    %p187 = scmp.ne.s32.totalorder %s176, %s179
    %p188 = scmp.eq.s32.totalorder %s17, 1
    %p189 = por %p187, %p188
    %p190 = scmp.ne.s32.totalorder %s179, %s180
    %p191 = scmp.eq.s32.totalorder %s17, 0
    %p192 = por %p190, %p191
    %p193 = scmp.ne.s32.totalorder %s179, %s180
    %p194 = scmp.eq.s32.totalorder %s18, 1
    %p195 = por %p193, %p194
    %p197 = scmp.ne.s32.totalorder %s180, %s196
    %p198 = scmp.eq.s32.totalorder %s18, 0
    %p199 = por %p197, %p198
    %p200 = scmp.le.s32.totalorder 1, %s12
    %p201 = scmp.lt.s32.totalorder %s12, 3
    %p202 = pnand %p200, %p201
    %p203 = pneg %p202
    // Predicated region
    $region9: #{fourier_unit_forward.3} parent=5 // pred_check
      _
    $region10: #{fourier_unit_forward.3} parent=5 // pred_check_branch
      %205 = sbr.rel (%p202) target = $region12
    $region11: #{fourier_unit_forward.3} parent=5 // pred_region
      %s206 = ssub.s32 %s12, 1
      // Predicated region
      $region13: #{fourier_unit_forward.3} parent=11 // pred_check
        %p207 = pneg %p101
      $region14: #{fourier_unit_forward.3} parent=11 // pred_check_branch
        %209 = sbr.rel (%p207) target = $region16
      $region15: #{fourier_unit_forward.3} parent=11 // pred_region
        _
      $region16: #{fourier_unit_forward.3} parent=11 // pred_fallthru
        _
      // Predicated region
      $region17: #{fourier_unit_forward.3} parent=11 // pred_check
        %p210 = pneg %p122
      $region18: #{fourier_unit_forward.3} parent=11 // pred_check_branch
        %212 = sbr.rel (%p210) target = $region20
      $region19: #{fourier_unit_forward.3} parent=11 // pred_region
        _
      $region20: #{fourier_unit_forward.3} parent=11 // pred_fallthru
        _
      // Predicated region
      $region21: #{fourier_unit_forward.3} parent=11 // pred_check
        %p213 = pneg %p143
      $region22: #{fourier_unit_forward.3} parent=11 // pred_check_branch
        %215 = sbr.rel (%p213) target = $region24
      $region23: #{fourier_unit_forward.3} parent=11 // pred_region
        _
      $region24: #{fourier_unit_forward.3} parent=11 // pred_fallthru
        _
      // Predicated region
      $region25: #{fourier_unit_forward.3} parent=11 // pred_check
        %p216 = pneg %p164
      $region26: #{fourier_unit_forward.3} parent=11 // pred_check_branch
        %218 = sbr.rel (%p216) target = $region28
      $region27: #{fourier_unit_forward.3} parent=11 // pred_region
        _
      $region28: #{fourier_unit_forward.3} parent=11 // pred_fallthru
        _
    $region12: #{fourier_unit_forward.3} parent=5 // pred_fallthru
      _
    %p219 = scmp.lt.s32.totalorder %s12, 2
    // Predicated region
    $region29: #{fourier_unit_forward.3} parent=5 // pred_check
      %p220 = pneg %p219
    $region30: #{fourier_unit_forward.3} parent=5 // pred_check_branch
      %222 = sbr.rel (%p220) target = $region32
    $region31: #{fourier_unit_forward.3} parent=5 // pred_region
      // Predicated region
      $region33: #{fourier_unit_forward.3} parent=31 // pred_check
        %p223 = pneg %p46
      $region34: #{fourier_unit_forward.3} parent=31 // pred_check_branch
        %225 = sbr.rel (%p223) target = $region36
      $region35: #{fourier_unit_forward.3} parent=31 // pred_region
        %s226 = smul.u32 2, %s20
        %p227 = scmp.lt.s32.totalorder %s19, 1
        %s228 = scalar_select %p227, %s19, 1
        %p229 = scmp.lt.s32.totalorder %s226, 1
        %s230 = scalar_select %p229, %s226, 1
        %s231 = smul.addr %s228, 2
        %s232 = sadd.s32 %s230, %s231
        %s233 = smul.addr %s232, 4
        %s234 = scalar_lea.vmem %s0, %s233
        %s235 = smul.u32 2, %s20
      $region36: #{fourier_unit_forward.3} parent=31 // pred_fallthru
        _
      // Predicated region
      $region37: #{fourier_unit_forward.3} parent=31 // pred_check
        %p236 = pneg %p74
      $region38: #{fourier_unit_forward.3} parent=31 // pred_check_branch
        %238 = sbr.rel (%p236) target = $region40
      $region39: #{fourier_unit_forward.3} parent=31 // pred_region
        %s239 = smul.u32 2, %s20
        %p240 = scmp.lt.s32.totalorder %s19, 1
        %s241 = scalar_select %p240, %s19, 1
        %p242 = scmp.lt.s32.totalorder %s239, 1
        %s243 = scalar_select %p242, %s239, 1
        %s244 = smul.addr %s241, 2
        %s245 = sadd.s32 %s243, %s244
        %s246 = smul.addr %s245, 4
        %s247 = scalar_lea.vmem %s1, %s246
        %s248 = smul.u32 2, %s20
      $region40: #{fourier_unit_forward.3} parent=31 // pred_fallthru
        _
    $region32: #{fourier_unit_forward.3} parent=5 // pred_fallthru
      _
    %p249 = scmp.le.s32.totalorder 1, %s12
    %p250 = scmp.lt.s32.totalorder %s12, 3
    %p251 = pnand %p249, %p250
    %p252 = pneg %p251
    // Predicated region
    $region41: #{fourier_unit_forward.3} parent=5 // pred_check
      _
    $region42: #{fourier_unit_forward.3} parent=5 // pred_check_branch
      %254 = sbr.rel (%p251) target = $region44
    $region43: #{fourier_unit_forward.3} parent=5 // pred_region
      %s255 = ssub.s32 %s12, 1
      %s256 = smul.u32 2, %s22
      %p257 = scmp.lt.s32.totalorder %s21, 1
      %s258 = scalar_select %p257, %s21, 1
      %p259 = scmp.lt.s32.totalorder %s256, 1
      %s260 = scalar_select %p259, %s256, 1
      %s261 = smul.addr %s258, 2
      %s262 = sadd.s32 %s260, %s261
      %s263 = smul.addr %s262, 4
      %s264 = scalar_lea.vmem %s0, %s263
      %p265 = pneg %p52
      %p266 = pneg %p49
      %s267 = smul.u32 2, %s22
      %p268 = scmp.lt.s32.totalorder %s21, 1
      %s269 = scalar_select %p268, %s21, 1
      %p270 = scmp.lt.s32.totalorder %s267, 1
      %s271 = scalar_select %p270, %s267, 1
      %s272 = smul.addr %s269, 2
      %s273 = sadd.s32 %s271, %s272
      %s274 = smul.addr %s273, 4
      %s275 = scalar_lea.vmem %s1, %s274
      %p276 = pneg %p80
      %p277 = pneg %p77
      %p278 = pneg %p101
      %p279 = pneg %p98
      %p280 = pneg %p122
      %p281 = pneg %p119
      %p282 = pneg %p143
      %p283 = pneg %p140
      %p284 = pneg %p164
      %p285 = pneg %p161
      %p286 = pneg %p192
      %p287 = pneg %p189
      %s288 = smul.u32 2, %s22
      %p289 = scmp.lt.s32.totalorder %s21, 1
      %s290 = scalar_select %p289, %s21, 1
      %p291 = scmp.lt.s32.totalorder %s288, 1
      %s292 = scalar_select %p291, %s288, 1
      %s293 = smul.addr %s290, 2
      %s294 = sadd.s32 %s292, %s293
      %s295 = smul.addr %s294, 8
      %s296 = scalar_lea.vmem %s6, %s295
      %s297 = smul.u32 2, %s22
      %p298 = scmp.lt.s32.totalorder %s21, 1
      %s299 = scalar_select %p298, %s21, 1
      %p300 = scmp.lt.s32.totalorder %s297, 1
      %s301 = scalar_select %p300, %s297, 1
      %s302 = smul.addr %s299, 2
      %s303 = sadd.s32 %s301, %s302
      %s304 = smul.addr %s303, 4
      %s305 = scalar_lea.vmem %s0, %s304
      %s306 = smul.u32 2, %s22
      %s307 = smul.u32 2, %s22
      %p308 = scmp.lt.s32.totalorder %s21, 1
      %s309 = scalar_select %p308, %s21, 1
      %p310 = scmp.lt.s32.totalorder %s307, 1
      %s311 = scalar_select %p310, %s307, 1
      %s312 = smul.addr %s309, 2
      %s313 = sadd.s32 %s311, %s312
      %s314 = smul.addr %s313, 4
      %s315 = scalar_lea.vmem %s1, %s314
      %s316 = smul.u32 2, %s22
      %s317 = smul.u32 2, %s22
      %p318 = scmp.lt.s32.totalorder %s21, 1
      %s319 = scalar_select %p318, %s21, 1
      %p320 = scmp.lt.s32.totalorder %s317, 1
      %s321 = scalar_select %p320, %s317, 1
      %s322 = smul.addr %s319, 2
      %s323 = sadd.s32 %s321, %s322
      %s324 = smul.addr %s323, 8
      %s325 = scalar_lea.vmem %s6, %s324
      %s326 = smul.u32 2, %s22
      %v327 = vld [vmem:[%s2] sm:$0xff]
      %v328 = vld [vmem:[%s305] sm:$0xff]
      %v329 = vld [vmem:[%s3] sm:$0xff]
      %v330 = vld [vmem:[%s315] sm:$0xff]
      %v332 = vcombine.high %v330, %v330
      %vm333 = vcmask 31744
      %v335 = vsel %vm333, %v329, 0
      %vm337 = vcmask 1043456
      %v338 = vsel %vm337, %v330, 0
      %v340 = vsel %vm337, %v332, 0
      %342 = vmatprep.subr.mxu0 %v340
      %343 = vmatpush1.msra.mxu0 %v338
      %344 = vmatprep.subr.mxu0 0.0
      %345 = vmatpush1.msra.mxu0 0.0
      %346 = vmatprep.subr.mxu0 0.0
      %347 = vmatpush1.msra.mxu0 0.0
      %348 = vmatprep.subr.mxu0 0.0
      %349 = vmatpush1.msra.mxu0 0.0
      %350 = vmatprep.subr.mxu0 0.0
      %351 = vmatpush1.msra.mxu0 0.0
      %352 = vmatprep.subr.mxu0 0.0
      %353 = vmatpush1.msra.mxu0 0.0
      %354 = vmatprep.subr.mxu0 0.0
      %355 = vmatpush1.msra.mxu0 0.0
      %356 = vmatprep.subr.mxu0 0.0
      %357 = vmatpush1.msra.mxu0 0.0
      %358 = vmatprep.subr.mxu0 0.0
      %359 = vmatpush1.msra.mxu0 0.0
      %360 = vmatprep.subr.mxu0 0.0
      %361 = vmatpush1.msra.mxu0 0.0
      %362 = vmatprep.subr.mxu0 0.0
      %363 = vmatpush1.msra.mxu0 0.0
      %364 = vmatprep.subr.mxu0 0.0
      %365 = vmatpush1.msra.mxu0 0.0
      %366 = vmatprep.subr.mxu0 0.0
      %367 = vmatpush1.msra.mxu0 0.0
      %368 = vmatprep.subr.mxu0 0.0
      %369 = vmatpush1.msra.mxu0 0.0
      %370 = vmatprep.subr.mxu0 0.0
      %371 = vmatpush1.msra.mxu0 0.0
      %372 = vmatprep.subr.mxu0 0.0
      %373 = vmatpush1.msra.mxu0 0.0
      %374 = vmatprep.subr.mxu0 0.0
      %375 = vmatpush1.msra.mxu0 0.0
      %376 = vmatprep.subr.mxu0 0.0
      %377 = vmatpush1.msra.mxu0 0.0
      %378 = vmatprep.subr.mxu0 0.0
      %379 = vmatpush1.msra.mxu0 0.0
      %380 = vmatprep.subr.mxu0 0.0
      %381 = vmatpush1.msra.mxu0 0.0
      %382 = vmatprep.subr.mxu0 0.0
      %383 = vmatpush1.msra.mxu0 0.0
      %384 = vmatprep.subr.mxu0 0.0
      %385 = vmatpush1.msra.mxu0 0.0
      %386 = vmatprep.subr.mxu0 0.0
      %387 = vmatpush1.msra.mxu0 0.0
      %388 = vmatprep.subr.mxu0 0.0
      %389 = vmatpush1.msra.mxu0 0.0
      %390 = vmatprep.subr.mxu0 0.0
      %391 = vmatpush1.msra.mxu0 0.0
      %392 = vmatprep.subr.mxu0 0.0
      %393 = vmatpush1.msra.mxu0 0.0
      %394 = vmatprep.subr.mxu0 0.0
      %395 = vmatpush1.msra.mxu0 0.0
      %396 = vmatprep.subr.mxu0 0.0
      %397 = vmatpush1.msra.mxu0 0.0
      %398 = vmatprep.subr.mxu0 0.0
      %399 = vmatpush1.msra.mxu0 0.0
      %400 = vmatprep.subr.mxu0 0.0
      %401 = vmatpush1.msra.mxu0 0.0
      %402 = vmatprep.subr.mxu0 0.0
      %403 = vmatpush1.msra.mxu0 0.0
      %404 = vmatprep.subr.mxu0 0.0
      %405 = vmatpush1.msra.mxu0 0.0
      %406 = vmatprep.mubr.f32.mxu0 0.0
      %407 = vmatmul.mubr.f32.gmra.mrb[0].mxu0 %v335
      %v408 = vpop.f32.mrb[0].mxu0
      %v409 = vadd.f32 0.0, %v408
      %v410 = vpop.f32.mrb[0].mxu0
      %v411 = vadd.f32 0.0, %v410
      %412 = vdwg.mxu0
      %v414 = vcombine.high %v328, %v328
      %v416 = vsel %vm333, %v327, 0
      %v418 = vsel %vm337, %v328, 0
      %v420 = vsel %vm337, %v414, 0
      %422 = vmatprep.subr.mxu0 %v420
      %423 = vmatpush1.msra.mxu0 %v418
      %424 = vmatprep.subr.mxu0 0.0
      %425 = vmatpush1.msra.mxu0 0.0
      %426 = vmatprep.subr.mxu0 0.0
      %427 = vmatpush1.msra.mxu0 0.0
      %428 = vmatprep.subr.mxu0 0.0
      %429 = vmatpush1.msra.mxu0 0.0
      %430 = vmatprep.subr.mxu0 0.0
      %431 = vmatpush1.msra.mxu0 0.0
      %432 = vmatprep.subr.mxu0 0.0
      %433 = vmatpush1.msra.mxu0 0.0
      %434 = vmatprep.subr.mxu0 0.0
      %435 = vmatpush1.msra.mxu0 0.0
      %436 = vmatprep.subr.mxu0 0.0
      %437 = vmatpush1.msra.mxu0 0.0
      %438 = vmatprep.subr.mxu0 0.0
      %439 = vmatpush1.msra.mxu0 0.0
      %440 = vmatprep.subr.mxu0 0.0
      %441 = vmatpush1.msra.mxu0 0.0
      %442 = vmatprep.subr.mxu0 0.0
      %443 = vmatpush1.msra.mxu0 0.0
      %444 = vmatprep.subr.mxu0 0.0
      %445 = vmatpush1.msra.mxu0 0.0
      %446 = vmatprep.subr.mxu0 0.0
      %447 = vmatpush1.msra.mxu0 0.0
      %448 = vmatprep.subr.mxu0 0.0
      %449 = vmatpush1.msra.mxu0 0.0
      %450 = vmatprep.subr.mxu0 0.0
      %451 = vmatpush1.msra.mxu0 0.0
      %452 = vmatprep.subr.mxu0 0.0
      %453 = vmatpush1.msra.mxu0 0.0
      %454 = vmatprep.subr.mxu0 0.0
      %455 = vmatpush1.msra.mxu0 0.0
      %456 = vmatprep.subr.mxu0 0.0
      %457 = vmatpush1.msra.mxu0 0.0
      %458 = vmatprep.subr.mxu0 0.0
      %459 = vmatpush1.msra.mxu0 0.0
      %460 = vmatprep.subr.mxu0 0.0
      %461 = vmatpush1.msra.mxu0 0.0
      %462 = vmatprep.subr.mxu0 0.0
      %463 = vmatpush1.msra.mxu0 0.0
      %464 = vmatprep.subr.mxu0 0.0
      %465 = vmatpush1.msra.mxu0 0.0
      %466 = vmatprep.subr.mxu0 0.0
      %467 = vmatpush1.msra.mxu0 0.0
      %468 = vmatprep.subr.mxu0 0.0
      %469 = vmatpush1.msra.mxu0 0.0
      %470 = vmatprep.subr.mxu0 0.0
      %471 = vmatpush1.msra.mxu0 0.0
      %472 = vmatprep.subr.mxu0 0.0
      %473 = vmatpush1.msra.mxu0 0.0
      %474 = vmatprep.subr.mxu0 0.0
      %475 = vmatpush1.msra.mxu0 0.0
      %476 = vmatprep.subr.mxu0 0.0
      %477 = vmatpush1.msra.mxu0 0.0
      %478 = vmatprep.subr.mxu0 0.0
      %479 = vmatpush1.msra.mxu0 0.0
      %480 = vmatprep.subr.mxu0 0.0
      %481 = vmatpush1.msra.mxu0 0.0
      %482 = vmatprep.subr.mxu0 0.0
      %483 = vmatpush1.msra.mxu0 0.0
      %484 = vmatprep.subr.mxu0 0.0
      %485 = vmatpush1.msra.mxu0 0.0
      %486 = vmatprep.mubr.f32.mxu0 0.0
      %487 = vmatmul.mubr.f32.gmra.mrb[0].mxu0 %v416
      %v488 = vpop.f32.mrb[0].mxu0
      %v489 = vadd.f32 %v409, %v488
      %v490 = vpop.f32.mrb[0].mxu0
      %v491 = vadd.f32 %v411, %v490
      %492 = vdwg.mxu0
      %v493 = vld [vmem:[%s4] sm:$0xff]
      %495 = vset.pattern.permute.xlu0 0
      %496 = vperm.xlu0 %495, %v493
      %v497 = vpop.permute.xlu0 %496
      %v499 = vmul.f32 %v489, %v497
      %v500 = vmul.f32 %v491, %v497
      %v501 = vld [vmem:[%s5] sm:$0xff]
      %503 = vset.pattern.permute.xlu0 0
      %504 = vperm.xlu0 %503, %v501
      %v505 = vpop.permute.xlu0 %504
      %v507 = vadd.f32 %v499, %v505
      %v508 = vadd.f32 %v500, %v505
      %v509 = vmax.f32 %v507, 0.0
      %v510 = vmax.f32 %v508, 0.0
      %511 = vst [vmem:[%s325] sm:$0xff] %v509
      %vm512 = vcmask 130048
      %513 = vst.msk [vmem:[%s325 + $0x8] sm:$0xff] %vm512, %v510
      %s514 = smul.u32 2, %s22
      %p515 = scmp.lt.s32.totalorder %s21, 1
      %s516 = scalar_select %p515, %s21, 1
      %p517 = scmp.lt.s32.totalorder %s514, 1
      %s518 = scalar_select %p517, %s514, 1
      %s519 = smul.addr %s516, 2
      %s520 = sadd.s32 %s518, %s519
      %s521 = smul.addr %s520, 8
      %s522 = scalar_lea.vmem %s6, %s521
      // Predicated region
      $region45: #{fourier_unit_forward.3} parent=43 // pred_check
        %p523 = pneg %p189
      $region46: #{fourier_unit_forward.3} parent=43 // pred_check_branch
        %525 = sbr.rel (%p523) target = $region48
      $region47: #{fourier_unit_forward.3} parent=43 // pred_region
        %s526 = smul.u32 2, %s22
      $region48: #{fourier_unit_forward.3} parent=43 // pred_fallthru
        _
    $region44: #{fourier_unit_forward.3} parent=5 // pred_fallthru
      _
    %p527 = scmp.le.s32.totalorder 2, %s12
    // Predicated region
    $region49: #{fourier_unit_forward.3} parent=5 // pred_check
      %p528 = pneg %p527
    $region50: #{fourier_unit_forward.3} parent=5 // pred_check_branch
      %530 = sbr.rel (%p528) target = $region52
    $region51: #{fourier_unit_forward.3} parent=5 // pred_region
      %s531 = ssub.s32 %s12, 2
      // Predicated region
      $region53: #{fourier_unit_forward.3} parent=51 // pred_check
        %p532 = pneg %p195
      $region54: #{fourier_unit_forward.3} parent=51 // pred_check_branch
        %534 = sbr.rel (%p532) target = $region56
      $region55: #{fourier_unit_forward.3} parent=51 // pred_region
        %s535 = smul.u32 2, %s24
        %p536 = scmp.lt.s32.totalorder %s23, 1
        %s537 = scalar_select %p536, %s23, 1
        %p538 = scmp.lt.s32.totalorder %s535, 1
        %s539 = scalar_select %p538, %s535, 1
        %s540 = smul.addr %s537, 2
        %s541 = sadd.s32 %s539, %s540
        %s542 = smul.addr %s541, 8
        %s543 = scalar_lea.vmem %s6, %s542
      $region56: #{fourier_unit_forward.3} parent=51 // pred_fallthru
        _
    $region52: #{fourier_unit_forward.3} parent=5 // pred_fallthru
      _
  $region6: #{fourier_unit_forward.3} parent=0 // loop_footer
    %s16 = sadd.s32 1, %s12
  $region7: #{fourier_unit_forward.3} parent=0 // loop_footer_branch
    %11 = sbr.rel target = $region3
  $region8: #{fourier_unit_forward.3} parent=0 // loop_exit
    _

// kernel: reverse.0
$region0: #{reverse.0}
  %s0 = inlined_call_operand.vmem [shape: f32[2,4,16,7], index: 0, kind: input, shape index: {}]
  %s1 = inlined_call_operand.vmem [shape: f32[2,4,16,7], index: 1, kind: output, shape index: {}]
  $region1: #{reverse.0} parent=0
    #allocation0 [shape = 'u8[65536]{0}', space=vmem, size = 0x10000, scoped, tag = 'operand span for operand 0']
    #allocation1 [shape = 'u8[32768]{0}', space=vmem, size = 0x8000, scoped, tag = 'operand span for operand 1']
    %s2 = scalar_lea.vmem [#allocation0], 8
    // Predicated region
    $region2: #{reverse.0} parent=1 // pred_check
      _
    $region3: #{reverse.0} parent=1 // pred_check_branch
      %4 = sbr.rel (0) target = $region5
    $region4: #{reverse.0} parent=1 // pred_region
      // Predicated region
      $region6: #{reverse.0} parent=4 // pred_check
        _
      $region7: #{reverse.0} parent=4 // pred_check_branch
        %6 = sbr.rel (0) target = $region9
      $region8: #{reverse.0} parent=4 // pred_region
        // Predicated region
        $region21: #{reverse.0} parent=8 // pred_check
          _
        $region22: #{reverse.0} parent=8 // pred_check_branch
          %35 = sbr.rel (0) target = $region24
        $region23: #{reverse.0} parent=8 // pred_region
          loop: start=0, step=1, limit=1
          $region25: #{reverse.0} parent=23 // loop_pre_header
            _
          $region26: #{reverse.0} parent=23 // loop_header
            %s37 = sphi 0, %s41
            %p38 = scmp.ge.s32.totalorder %s37, 1
            %s42 = sphi %s0, %s0
            %s43 = sphi %s2, %s2
          $region27: #{reverse.0} parent=23 // loop_header_branch
            %40 = sbr.rel (%p38) target = $region31
          $region28: #{reverse.0} parent=23 // loop_body
            %v44 = vld [vmem:[%s42] sm:$0xff]
            %45 = vst [vmem:[%s43] sm:$0xff] %v44
            %v46 = vld [vmem:[%s42 + $0x8] sm:$0xff]
            %47 = vst [vmem:[%s43 + $0x10] sm:$0xff] %v46
            %v48 = vld [vmem:[%s42 + $0x10] sm:$0xff]
            %49 = vst [vmem:[%s43 + $0x20] sm:$0xff] %v48
            %v50 = vld [vmem:[%s42 + $0x18] sm:$0xff]
            %51 = vst [vmem:[%s43 + $0x30] sm:$0xff] %v50
            %v52 = vld [vmem:[%s42 + $0x20] sm:$0xff]
            %53 = vst [vmem:[%s43 + $0x40] sm:$0xff] %v52
            %v54 = vld [vmem:[%s42 + $0x28] sm:$0xff]
            %55 = vst [vmem:[%s43 + $0x50] sm:$0xff] %v54
            %v56 = vld [vmem:[%s42 + $0x30] sm:$0xff]
            %57 = vst [vmem:[%s43 + $0x60] sm:$0xff] %v56
            %v58 = vld [vmem:[%s42 + $0x38] sm:$0xff]
            %59 = vst [vmem:[%s43 + $0x70] sm:$0xff] %v58
          $region29: #{reverse.0} parent=23 // loop_footer
            %s41 = sadd.s32 1, %s37
          $region30: #{reverse.0} parent=23 // loop_footer_branch
            %36 = sbr.rel target = $region26
          $region31: #{reverse.0} parent=23 // loop_exit
            _
        $region24: #{reverse.0} parent=8 // pred_fallthru
          _
        // Predicated region
        $region32: #{reverse.0} parent=8 // pred_check
          _
        $region33: #{reverse.0} parent=8 // pred_check_branch
          %61 = sbr.rel target = $region35
        $region34: #{reverse.0} parent=8 // pred_region
          _
        $region35: #{reverse.0} parent=8 // pred_fallthru
          _
      $region9: #{reverse.0} parent=4 // pred_fallthru
        _
      // Predicated region
      $region10: #{reverse.0} parent=4 // pred_check
        _
      $region11: #{reverse.0} parent=4 // pred_check_branch
        %8 = sbr.rel target = $region13
      $region12: #{reverse.0} parent=4 // pred_region
        loop: start=0, step=1, limit=1
        $region14: #{reverse.0} parent=12 // loop_pre_header
          _
        $region15: #{reverse.0} parent=12 // loop_header
          %s11 = sphi 0, %s15
          %p12 = scmp.ge.s32.totalorder %s11, 1
          %s16 = sphi %s0, %s0
          %s17 = sphi %s2, %s2
        $region16: #{reverse.0} parent=12 // loop_header_branch
          %14 = sbr.rel (%p12) target = $region20
        $region17: #{reverse.0} parent=12 // loop_body
          %v18 = vld [vmem:[%s16] sm:$0xff]
          %19 = vst [vmem:[%s17] sm:$0xff] %v18
          %v20 = vld [vmem:[%s16 + $0x8] sm:$0xff]
          %21 = vst [vmem:[%s17 + $0x10] sm:$0xff] %v20
          %v22 = vld [vmem:[%s16 + $0x10] sm:$0xff]
          %23 = vst [vmem:[%s17 + $0x20] sm:$0xff] %v22
          %v24 = vld [vmem:[%s16 + $0x18] sm:$0xff]
          %25 = vst [vmem:[%s17 + $0x30] sm:$0xff] %v24
          %v26 = vld [vmem:[%s16 + $0x20] sm:$0xff]
          %27 = vst [vmem:[%s17 + $0x40] sm:$0xff] %v26
          %v28 = vld [vmem:[%s16 + $0x28] sm:$0xff]
          %29 = vst [vmem:[%s17 + $0x50] sm:$0xff] %v28
          %v30 = vld [vmem:[%s16 + $0x30] sm:$0xff]
          %31 = vst [vmem:[%s17 + $0x60] sm:$0xff] %v30
          %v32 = vld [vmem:[%s16 + $0x38] sm:$0xff]
          %33 = vst [vmem:[%s17 + $0x70] sm:$0xff] %v32
        $region18: #{reverse.0} parent=12 // loop_footer
          %s15 = sadd.s32 1, %s11
        $region19: #{reverse.0} parent=12 // loop_footer_branch
          %10 = sbr.rel target = $region15
        $region20: #{reverse.0} parent=12 // loop_exit
          _
      $region13: #{reverse.0} parent=4 // pred_fallthru
        _
    $region5: #{reverse.0} parent=1 // pred_fallthru
      _
    %62 = vnop
    %s63 = scalar_lea.vmem [#allocation0], 7
    %v64 = vld [vmem:[%s63] ss:$-1 sm:$0xff]
    %v65 = vrot.slane %v64, 1
    %66 = vst [vmem:[#allocation1] sm:$0xff] %v65
    %s67 = scalar_lea.vmem [#allocation0], 8
    %s68 = scalar_lea.vmem %s67, 7 [#allocation0]
    %v69 = vld [vmem:[%s68] ss:$-1 sm:$0xff]
    %v70 = vrot.slane %v69, 1
    %v71 = vlaneseq
    %v72 = vshrl.u32 %v71, 7
    %vm73 = vcmp.lt.s32.totalorder %v72, 7
    %74 = vst.msk [vmem:[#allocation1] sm:$0xff] %vm73, %v70
    %s75 = scalar_lea.vmem [#allocation1], 8
    %s76 = scalar_lea.vmem [#allocation0], 16
    %s77 = scalar_lea.vmem %s76, 7 [#allocation0]
    %v78 = vld [vmem:[%s77] ss:$-1 sm:$0xff]
    %v79 = vrot.slane %v78, 1
    %80 = vst [vmem:[%s75] sm:$0xff] %v79
    %s81 = scalar_lea.vmem %s76, 8 [#allocation0]
    %s82 = scalar_lea.vmem %s81, 7 [#allocation0]
    %v83 = vld [vmem:[%s82] ss:$-1 sm:$0xff]
    %v84 = vrot.slane %v83, 1
    %v85 = vlaneseq
    %v86 = vshrl.u32 %v85, 7
    %vm87 = vcmp.lt.s32.totalorder %v86, 7
    %88 = vst.msk [vmem:[%s75] sm:$0xff] %vm87, %v84
    %s89 = scalar_lea.vmem [#allocation1], 16
    %s90 = scalar_lea.vmem [#allocation0], 32
    %s91 = scalar_lea.vmem %s90, 7 [#allocation0]
    %v92 = vld [vmem:[%s91] ss:$-1 sm:$0xff]
    %v93 = vrot.slane %v92, 1
    %94 = vst [vmem:[%s89] sm:$0xff] %v93
    %s95 = scalar_lea.vmem %s90, 8 [#allocation0]
    %s96 = scalar_lea.vmem %s95, 7 [#allocation0]
    %v97 = vld [vmem:[%s96] ss:$-1 sm:$0xff]
    %v98 = vrot.slane %v97, 1
    %v99 = vlaneseq
    %v100 = vshrl.u32 %v99, 7
    %vm101 = vcmp.lt.s32.totalorder %v100, 7
    %102 = vst.msk [vmem:[%s89] sm:$0xff] %vm101, %v98
    %s103 = scalar_lea.vmem [#allocation1], 24
    %s104 = scalar_lea.vmem [#allocation0], 48
    %s105 = scalar_lea.vmem %s104, 7 [#allocation0]
    %v106 = vld [vmem:[%s105] ss:$-1 sm:$0xff]
    %v107 = vrot.slane %v106, 1
    %108 = vst [vmem:[%s103] sm:$0xff] %v107
    %s109 = scalar_lea.vmem %s104, 8 [#allocation0]
    %s110 = scalar_lea.vmem %s109, 7 [#allocation0]
    %v111 = vld [vmem:[%s110] ss:$-1 sm:$0xff]
    %v112 = vrot.slane %v111, 1
    %v113 = vlaneseq
    %v114 = vshrl.u32 %v113, 7
    %vm115 = vcmp.lt.s32.totalorder %v114, 7
    %116 = vst.msk [vmem:[%s103] sm:$0xff] %vm115, %v112
    %s117 = scalar_lea.vmem [#allocation1], 32
    %s118 = scalar_lea.vmem [#allocation0], 64
    %s119 = scalar_lea.vmem %s118, 7 [#allocation0]
    %v120 = vld [vmem:[%s119] ss:$-1 sm:$0xff]
    %v121 = vrot.slane %v120, 1
    %122 = vst [vmem:[%s117] sm:$0xff] %v121
    %s123 = scalar_lea.vmem %s118, 8 [#allocation0]
    %s124 = scalar_lea.vmem %s123, 7 [#allocation0]
    %v125 = vld [vmem:[%s124] ss:$-1 sm:$0xff]
    %v126 = vrot.slane %v125, 1
    %v127 = vlaneseq
    %v128 = vshrl.u32 %v127, 7
    %vm129 = vcmp.lt.s32.totalorder %v128, 7
    %130 = vst.msk [vmem:[%s117] sm:$0xff] %vm129, %v126
    %s131 = scalar_lea.vmem [#allocation1], 40
    %s132 = scalar_lea.vmem [#allocation0], 80
    %s133 = scalar_lea.vmem %s132, 7 [#allocation0]
    %v134 = vld [vmem:[%s133] ss:$-1 sm:$0xff]
    %v135 = vrot.slane %v134, 1
    %136 = vst [vmem:[%s131] sm:$0xff] %v135
    %s137 = scalar_lea.vmem %s132, 8 [#allocation0]
    %s138 = scalar_lea.vmem %s137, 7 [#allocation0]
    %v139 = vld [vmem:[%s138] ss:$-1 sm:$0xff]
    %v140 = vrot.slane %v139, 1
    %v141 = vlaneseq
    %v142 = vshrl.u32 %v141, 7
    %vm143 = vcmp.lt.s32.totalorder %v142, 7
    %144 = vst.msk [vmem:[%s131] sm:$0xff] %vm143, %v140
    %s145 = scalar_lea.vmem [#allocation1], 48
    %s146 = scalar_lea.vmem [#allocation0], 96
    %s147 = scalar_lea.vmem %s146, 7 [#allocation0]
    %v148 = vld [vmem:[%s147] ss:$-1 sm:$0xff]
    %v149 = vrot.slane %v148, 1
    %150 = vst [vmem:[%s145] sm:$0xff] %v149
    %s151 = scalar_lea.vmem %s146, 8 [#allocation0]
    %s152 = scalar_lea.vmem %s151, 7 [#allocation0]
    %v153 = vld [vmem:[%s152] ss:$-1 sm:$0xff]
    %v154 = vrot.slane %v153, 1
    %v155 = vlaneseq
    %v156 = vshrl.u32 %v155, 7
    %vm157 = vcmp.lt.s32.totalorder %v156, 7
    %158 = vst.msk [vmem:[%s145] sm:$0xff] %vm157, %v154
    %s159 = scalar_lea.vmem [#allocation1], 56
    %s160 = scalar_lea.vmem [#allocation0], 112
    %s161 = scalar_lea.vmem %s160, 7 [#allocation0]
    %v162 = vld [vmem:[%s161] ss:$-1 sm:$0xff]
    %v163 = vrot.slane %v162, 1
    %164 = vst [vmem:[%s159] sm:$0xff] %v163
    %s165 = scalar_lea.vmem %s160, 8 [#allocation0]
    %s166 = scalar_lea.vmem %s165, 7 [#allocation0]
    %v167 = vld [vmem:[%s166] ss:$-1 sm:$0xff]
    %v168 = vrot.slane %v167, 1
    %v169 = vlaneseq
    %v170 = vshrl.u32 %v169, 7
    %vm171 = vcmp.lt.s32.totalorder %v170, 7
    %172 = vst.msk [vmem:[%s159] sm:$0xff] %vm171, %v168
    // Predicated region
    $region36: #{reverse.0} parent=1 // pred_check
      _
    $region37: #{reverse.0} parent=1 // pred_check_branch
      %174 = sbr.rel (0) target = $region39
    $region38: #{reverse.0} parent=1 // pred_region
      // Predicated region
      $region40: #{reverse.0} parent=38 // pred_check
        _
      $region41: #{reverse.0} parent=38 // pred_check_branch
        %176 = sbr.rel (0) target = $region43
      $region42: #{reverse.0} parent=38 // pred_region
        // Predicated region
        $region55: #{reverse.0} parent=42 // pred_check
          _
        $region56: #{reverse.0} parent=42 // pred_check_branch
          %205 = sbr.rel (0) target = $region58
        $region57: #{reverse.0} parent=42 // pred_region
          loop: start=0, step=1, limit=1
          $region59: #{reverse.0} parent=57 // loop_pre_header
            _
          $region60: #{reverse.0} parent=57 // loop_header
            %s207 = sphi 0, %s211
            %p208 = scmp.ge.s32.totalorder %s207, 1
            %s212 = sphi [#allocation1], [#allocation1]
            %s213 = sphi %s1, %s1
          $region61: #{reverse.0} parent=57 // loop_header_branch
            %210 = sbr.rel (%p208) target = $region65
          $region62: #{reverse.0} parent=57 // loop_body
            %v214 = vld [vmem:[%s212] sm:$0xff]
            %215 = vst [vmem:[%s213] sm:$0xff] %v214
            %v216 = vld [vmem:[%s212 + $0x8] sm:$0xff]
            %217 = vst [vmem:[%s213 + $0x8] sm:$0xff] %v216
            %v218 = vld [vmem:[%s212 + $0x10] sm:$0xff]
            %219 = vst [vmem:[%s213 + $0x10] sm:$0xff] %v218
            %v220 = vld [vmem:[%s212 + $0x18] sm:$0xff]
            %221 = vst [vmem:[%s213 + $0x18] sm:$0xff] %v220
            %v222 = vld [vmem:[%s212 + $0x20] sm:$0xff]
            %223 = vst [vmem:[%s213 + $0x20] sm:$0xff] %v222
            %v224 = vld [vmem:[%s212 + $0x28] sm:$0xff]
            %225 = vst [vmem:[%s213 + $0x28] sm:$0xff] %v224
            %v226 = vld [vmem:[%s212 + $0x30] sm:$0xff]
            %227 = vst [vmem:[%s213 + $0x30] sm:$0xff] %v226
            %v228 = vld [vmem:[%s212 + $0x38] sm:$0xff]
            %229 = vst [vmem:[%s213 + $0x38] sm:$0xff] %v228
          $region63: #{reverse.0} parent=57 // loop_footer
            %s211 = sadd.s32 1, %s207
          $region64: #{reverse.0} parent=57 // loop_footer_branch
            %206 = sbr.rel target = $region60
          $region65: #{reverse.0} parent=57 // loop_exit
            _
        $region58: #{reverse.0} parent=42 // pred_fallthru
          _
        // Predicated region
        $region66: #{reverse.0} parent=42 // pred_check
          _
        $region67: #{reverse.0} parent=42 // pred_check_branch
          %231 = sbr.rel target = $region69
        $region68: #{reverse.0} parent=42 // pred_region
          _
        $region69: #{reverse.0} parent=42 // pred_fallthru
          _
      $region43: #{reverse.0} parent=38 // pred_fallthru
        _
      // Predicated region
      $region44: #{reverse.0} parent=38 // pred_check
        _
      $region45: #{reverse.0} parent=38 // pred_check_branch
        %178 = sbr.rel target = $region47
      $region46: #{reverse.0} parent=38 // pred_region
        loop: start=0, step=1, limit=1
        $region48: #{reverse.0} parent=46 // loop_pre_header
          _
        $region49: #{reverse.0} parent=46 // loop_header
          %s181 = sphi 0, %s185
          %p182 = scmp.ge.s32.totalorder %s181, 1
          %s186 = sphi [#allocation1], [#allocation1]
          %s187 = sphi %s1, %s1
        $region50: #{reverse.0} parent=46 // loop_header_branch
          %184 = sbr.rel (%p182) target = $region54
        $region51: #{reverse.0} parent=46 // loop_body
          %v188 = vld [vmem:[%s186] sm:$0xff]
          %189 = vst [vmem:[%s187] sm:$0xff] %v188
          %v190 = vld [vmem:[%s186 + $0x8] sm:$0xff]
          %191 = vst [vmem:[%s187 + $0x8] sm:$0xff] %v190
          %v192 = vld [vmem:[%s186 + $0x10] sm:$0xff]
          %193 = vst [vmem:[%s187 + $0x10] sm:$0xff] %v192
          %v194 = vld [vmem:[%s186 + $0x18] sm:$0xff]
          %195 = vst [vmem:[%s187 + $0x18] sm:$0xff] %v194
          %v196 = vld [vmem:[%s186 + $0x20] sm:$0xff]
          %197 = vst [vmem:[%s187 + $0x20] sm:$0xff] %v196
          %v198 = vld [vmem:[%s186 + $0x28] sm:$0xff]
          %199 = vst [vmem:[%s187 + $0x28] sm:$0xff] %v198
          %v200 = vld [vmem:[%s186 + $0x30] sm:$0xff]
          %201 = vst [vmem:[%s187 + $0x30] sm:$0xff] %v200
          %v202 = vld [vmem:[%s186 + $0x38] sm:$0xff]
          %203 = vst [vmem:[%s187 + $0x38] sm:$0xff] %v202
        $region52: #{reverse.0} parent=46 // loop_footer
          %s185 = sadd.s32 1, %s181
        $region53: #{reverse.0} parent=46 // loop_footer_branch
          %180 = sbr.rel target = $region49
        $region54: #{reverse.0} parent=46 // loop_exit
          _
      $region47: #{reverse.0} parent=38 // pred_fallthru
        _
    $region39: #{reverse.0} parent=1 // pred_fallthru
      _
    %232 = vnop

</llo_original>
